<compile_context>
chip_gen: v6e
topology: v6e:2x2x1
jax: 0.10.0
libtpu: 0.0.40
codegen_flags: <defaults>
</compile_context>

<pallas_src>
import jax
import jax.numpy as jnp
from jax import lax
from jax.experimental import pallas as pl
from jax.experimental.pallas import tpu as pltpu

_LANE = 128
_ROW_TILE = 16          # sublane tile that is safe for both f32 and bf16 activations
_HIDDEN = 512           # fixed by the module (nn.Linear(512, ...))


def _round_up(x, m):
    return (x + m - 1) // m * m


def _cdiv(a, b):
    return -(-a // b)


def _use_fused_second_layer():
    """Block-diag second-layer fusion fills the 256-wide MXU on v6e/v7x, but would
    double second-layer K with zeros on the 128x128 MXU of v5e/older."""
    try:
        kind = jax.devices()[0].device_kind.lower()
    except Exception:
        return False
    return ("v6" in kind) or ("v7" in kind)


# ---------------------------------------------------------------------------
# Kernels
# ---------------------------------------------------------------------------
def _make_fused_kernel(f_pad):
    """v6e/v7x path: fused first layer + block-diag fused second layer."""

    def kernel(h_ref, w13_ref, b13_ref, w24_ref, b24_ref, zc_ref):
        # shared leading ReLU (both projectors start with nn.ReLU())
        r16 = jnp.maximum(h_ref[...], 0).astype(jnp.bfloat16)            # [tb, 512]

        # fused first layers of both heads: [tb,512] @ [512,1024]
        tu = jnp.dot(r16, w13_ref[...],
                     preferred_element_type=jnp.float32) + b13_ref[...]
        tu16 = jnp.maximum(tu, 0.0).astype(jnp.bfloat16)                 # [tb, 1024]

        # block-diagonal fused second layers: one 256-wide MXU pass
        zc = jnp.dot(tu16, w24_ref[...],
                     preferred_element_type=jnp.float32) + b24_ref[...]  # [tb, f+c]

        # instance branch: F.normalize(dim=1) == z * rsqrt(max(sumsq, 1e-24))
        z = zc[:, :f_pad]
        inv = lax.rsqrt(jnp.maximum(jnp.sum(z * z, axis=1, keepdims=True), 1e-24))
        zc_ref[:, :f_pad] = z * inv
        # cluster branch: raw logits (no softmax in Network.forward)
        zc_ref[:, f_pad:] = zc[:, f_pad:]

    return kernel


def _make_split_kernel(f_pad):
    """v5e/older path: fused first layer, two separate N=128 second-layer dots."""

    def kernel(h_ref, w13_ref, b13_ref, w2_ref, b2_ref, w4_ref, b4_ref, zc_ref):
        r16 = jnp.maximum(h_ref[...], 0).astype(jnp.bfloat16)            # [tb, 512]

        tu = jnp.maximum(
            jnp.dot(r16, w13_ref[...],
                    preferred_element_type=jnp.float32) + b13_ref[...], 0.0)
        t16 = tu[:, :_HIDDEN].astype(jnp.bfloat16)                       # instance
        u16 = tu[:, _HIDDEN:].astype(jnp.bfloat16)                       # cluster

        z = jnp.dot(t16, w2_ref[...],
                    preferred_element_type=jnp.float32) + b2_ref[...]
        inv = lax.rsqrt(jnp.maximum(jnp.sum(z * z, axis=1, keepdims=True), 1e-24))
        zc_ref[:, :f_pad] = z * inv
        zc_ref[:, f_pad:] = jnp.dot(u16, w4_ref[...],
                                    preferred_element_type=jnp.float32) + b4_ref[...]

    return kernel


# ---------------------------------------------------------------------------
# Parameter packing
# ---------------------------------------------------------------------------
def pack_params(params, feature_dim, class_num, fuse_second):
    """Pack / lane-pad torch-equivalent per-layer params into kernel layout."""
    w1, b1, w2, b2, w3, b3, w4, b4 = params
    f_pad = _round_up(max(feature_dim, _LANE), _LANE)
    c_pad = _round_up(max(class_num, _LANE), _LANE)

    # fused first layers (both heads): [512, 1024]
    w13 = jnp.concatenate([w1, w3], axis=1).astype(jnp.bfloat16)
    b13 = jnp.concatenate([b1, b3], axis=1).astype(jnp.float32)          # [1, 1024]

    w2p = jnp.zeros((_HIDDEN, f_pad), jnp.float32).at[:, :feature_dim].set(w2)
    w4p = jnp.zeros((_HIDDEN, c_pad), jnp.float32).at[:, :class_num].set(w4)
    b24 = (jnp.zeros((1, f_pad + c_pad), jnp.float32)
           .at[:, :feature_dim].set(b2)
           .at[:, f_pad:f_pad + class_num].set(b4))

    if fuse_second:
        # block-diagonal [[w2p, 0], [0, w4p]] : [1024, f_pad + c_pad]
        w24 = (jnp.zeros((2 * _HIDDEN, f_pad + c_pad), jnp.float32)
               .at[:_HIDDEN, :f_pad].set(w2p)
               .at[_HIDDEN:, f_pad:].set(w4p))
        weights = (w13, b13, w24.astype(jnp.bfloat16), b24)
    else:
        weights = (w13, b13,
                   w2p.astype(jnp.bfloat16), b24[:, :f_pad],
                   w4p.astype(jnp.bfloat16), b24[:, f_pad:])
    return weights, f_pad, c_pad


# ---------------------------------------------------------------------------
# Pallas wrapper: both heads, all rows, one kernel
# ---------------------------------------------------------------------------
def projector_heads(h, weights, feature_dim, class_num, f_pad, c_pad,
                    fuse_second, tile_b=512):
    """Runs both projector heads on features h [N, 512] in one Pallas kernel.

    Returns (z, c): z = L2-normalized instance embedding [N, feature_dim],
                    c = cluster logits [N, class_num].
    """
    n = h.shape[0]

    # Adaptive batch tiling: big tiles amortize the ~0.35us/step overhead, but keep
    # at least 2 grid steps when there is enough work so both v7x cores are used.
    if n <= _ROW_TILE:
        steps = 1
        tb = _round_up(max(n, _ROW_TILE), _ROW_TILE)
    else:
        steps = max(2, _cdiv(n, tile_b))
        tb = _round_up(_cdiv(n, steps), _ROW_TILE)
        steps = _cdiv(n, tb)
    n_pad = tb * steps
    if n_pad != n:
        h = jnp.pad(h, ((0, n_pad - n), (0, 0)))

    wide = f_pad + c_pad
    const = lambda i: (0, 0)
    kernel = (_make_fused_kernel if fuse_second else _make_split_kernel)(f_pad)

    in_specs = [pl.BlockSpec((tb, _HIDDEN), lambda i: (i, 0))]           # activations
    in_specs += [pl.BlockSpec(w.shape, const) for w in weights]          # resident

    zc = pl.pallas_call(
        kernel,
        out_shape=jax.ShapeDtypeStruct((n_pad, wide), jnp.float32),
        grid=(steps,),
        in_specs=in_specs,
        out_specs=pl.BlockSpec((tb, wide), lambda i: (i, 0)),
        compiler_params=pltpu.CompilerParams(
            dimension_semantics=("parallel",)),                          # megacore
    )(h, *weights)

    return zc[:n, :feature_dim], zc[:n, f_pad:f_pad + class_num]


def network_forward(x_i, x_j, resnet_fn, params, feature_dim, class_num,
                    return_weak=True):
    """Mirrors Network.forward(x_i, x_j, return_weak)."""
    B = x_i.shape[0]
    # Single backbone pass on the concatenated [2B] image batch.
    h = resnet_fn(jnp.concatenate([x_i, x_j], axis=0))                   # [2B, 512]

    fuse_second = _use_fused_second_layer()
    weights, f_pad, c_pad = pack_params(params, feature_dim, class_num, fuse_second)
    z, c = projector_heads(h, weights, feature_dim, class_num, f_pad, c_pad,
                           fuse_second)

    z_i, z_j = z[:B], z[B:]
    c_i, c_j = c[:B], c[B:]
    if return_weak:
        return z_i, z_j, c_i, c_j
    return z_i, z_j, c_j


# ---------------------------------------------------------------------------
# Init helpers (mirror torch nn.Linear defaults / trunc_normal_)
# ---------------------------------------------------------------------------
def _linear_init(key, fan_in, fan_out):
    kw, kb = jax.random.split(key)
    bound = 1.0 / jnp.sqrt(float(fan_in))
    w = jax.random.uniform(kw, (fan_in, fan_out), jnp.float32, -bound, bound)
    b = jax.random.uniform(kb, (1, fan_out), jnp.float32, -bound, bound)
    return w, b


def _trunc_normal_init(key, fan_in, fan_out, std=0.02):
    kw, kb = jax.random.split(key)
    w = jnp.clip(std * jax.random.normal(kw, (fan_in, fan_out), jnp.float32),
                 -2.0 * std, 2.0 * std)
    bound = 1.0 / jnp.sqrt(float(fan_in))
    b = jax.random.uniform(kb, (1, fan_out), jnp.float32, -bound, bound)
    return w, b


if __name__ == "__main__":
    key = jax.random.PRNGKey(0)
    B, C, H, W = 2, 3, 16, 16           # small NCHW images
    hidden = _HIDDEN                     # resnet feature dim (fixed by the module)
    feature_dim = 128                    # instance embedding dim
    class_num = 10                       # number of clusters

    ks = jax.random.split(key, 8)

    x_i = jax.random.normal(ks[0], (B, C, H, W), jnp.float32)
    x_j = jax.random.normal(ks[1], (B, C, H, W), jnp.float32)

    # stub resnet backbone (plain-JAX glue): flatten NCHW -> linear -> 512 (bf16)
    w_resnet = 0.02 * jax.random.normal(ks[2], (C * H * W, hidden), jnp.float32)

    def resnet_stub(x):
        # producer emits bf16 directly (no standalone XLA cast op)
        return (x.reshape(x.shape[0], -1) @ w_resnet).astype(jnp.bfloat16)

    # instance projector params (default Linear init)
    w1, b1 = _linear_init(ks[3], hidden, hidden)             # Linear(512, 512)
    w2, b2 = _linear_init(ks[4], hidden, feature_dim)        # Linear(512, feature_dim)
    # cluster projector params (weights trunc_normal_(std=0.02) as in __init__)
    w3, b3 = _trunc_normal_init(ks[5], hidden, hidden)       # Linear(512, 512)
    w4, b4 = _trunc_normal_init(ks[6], hidden, class_num)    # Linear(512, class_num)

    params = (w1, b1, w2, b2, w3, b3, w4, b4)

    z_i, z_j, c_i, c_j = network_forward(x_i, x_j, resnet_stub, params,
                                         feature_dim, class_num, return_weak=True)
    jax.block_until_ready((z_i, z_j, c_i, c_j))

    assert z_i.shape == (B, feature_dim) and c_i.shape == (B, class_num)

    # lightweight sanity check vs. plain-JAX reference (same bf16-matmul scheme)
    def ref_heads(h16):
        r16 = jnp.maximum(h16, 0).astype(jnp.bfloat16)
        t = jnp.maximum(
            jnp.dot(r16, w1.astype(jnp.bfloat16),
                    preferred_element_type=jnp.float32) + b1, 0.0)
        z = jnp.dot(t.astype(jnp.bfloat16), w2.astype(jnp.bfloat16),
                    preferred_element_type=jnp.float32) + b2
        z = z / jnp.maximum(jnp.linalg.norm(z, axis=1, keepdims=True), 1e-12)
        u = jnp.maximum(
            jnp.dot(r16, w3.astype(jnp.bfloat16),
                    preferred_element_type=jnp.float32) + b3, 0.0)
        c = jnp.dot(u.astype(jnp.bfloat16), w4.astype(jnp.bfloat16),
                    preferred_element_type=jnp.float32) + b4
        return z, c

    z_ref_i, c_ref_i = ref_heads(resnet_stub(x_i))
    z_ref_j, c_ref_j = ref_heads(resnet_stub(x_j))
    assert jnp.allclose(z_i, z_ref_i, atol=5e-3), "instance head mismatch (x_i)"
    assert jnp.allclose(c_i, c_ref_i, atol=5e-3), "cluster head mismatch (x_i)"
    assert jnp.allclose(z_j, z_ref_j, atol=5e-3), "instance head mismatch (x_j)"
    assert jnp.allclose(c_j, c_ref_j, atol=5e-3), "cluster head mismatch (x_j)"

    print("KERNEL_OK")
</pallas_src>

<mosaic_0001>
module attributes {stable_mosaic.version = 11 : i64} {
  func.func @kernel(%arg0: i32, %arg1: memref<16x512xbf16, #tpu.memory_space<vmem>>, %arg2: memref<512x1024xbf16, #tpu.memory_space<vmem>>, %arg3: memref<1x1024xf32, #tpu.memory_space<vmem>>, %arg4: memref<512x128xbf16, #tpu.memory_space<vmem>>, %arg5: memref<1x128xf32, #tpu.memory_space<vmem>>, %arg6: memref<512x128xbf16, #tpu.memory_space<vmem>>, %arg7: memref<1x128xf32, #tpu.memory_space<vmem>>, %arg8: memref<16x256xf32, #tpu.memory_space<vmem>>) attributes {dimension_semantics = [#tpu.dimension_semantics<parallel>], iteration_bounds = array<i64: 1>, scalar_prefetch = 0 : i64, scratch_operands = 0 : i64, tpu.core_type = #tpu.core_type<tc>, window_params = [{transform_indices = @transform_0, window_bounds = array<i64: 16, 512>}, {pipeline_mode = #tpu.pipeline_mode<synchronous>, transform_indices = @transform_1, window_bounds = array<i64: 512, 1024>}, {pipeline_mode = #tpu.pipeline_mode<synchronous>, transform_indices = @transform_2, window_bounds = array<i64: 1, 1024>}, {pipeline_mode = #tpu.pipeline_mode<synchronous>, transform_indices = @transform_3, window_bounds = array<i64: 512, 128>}, {pipeline_mode = #tpu.pipeline_mode<synchronous>, transform_indices = @transform_4, window_bounds = array<i64: 1, 128>}, {pipeline_mode = #tpu.pipeline_mode<synchronous>, transform_indices = @transform_5, window_bounds = array<i64: 512, 128>}, {pipeline_mode = #tpu.pipeline_mode<synchronous>, transform_indices = @transform_6, window_bounds = array<i64: 1, 128>}, {transform_indices = @transform_7, window_bounds = array<i64: 16, 256>}]} {
    %c0 = arith.constant 0 : index
    %c0_0 = arith.constant 0 : index
    %0 = vector.load %arg1[%c0, %c0_0] : memref<16x512xbf16, #tpu.memory_space<vmem>>, vector<16x512xbf16>
    %cst = arith.constant 0.000000e+00 : bf16
    %1 = vector.broadcast %cst : bf16 to vector<16x512xbf16>
    %2 = arith.maximumf %0, %1 : vector<16x512xbf16>
    %c0_1 = arith.constant 0 : index
    %c0_2 = arith.constant 0 : index
    %3 = vector.load %arg2[%c0_1, %c0_2] : memref<512x1024xbf16, #tpu.memory_space<vmem>>, vector<512x1024xbf16>
    %cst_3 = arith.constant dense<0.000000e+00> : vector<16x1024xf32>
    %4 = tpu.matmul %2, %3, %cst_3 {dimension_numbers = #tpu.dot_dimension_numbers<[1], [0], [0], [1], [0, 0, 1, 1], [], []>} : vector<16x512xbf16>, vector<512x1024xbf16>, vector<16x1024xf32> -> vector<16x1024xf32>
    %c0_4 = arith.constant 0 : index
    %c0_5 = arith.constant 0 : index
    %5 = vector.load %arg3[%c0_4, %c0_5] : memref<1x1024xf32, #tpu.memory_space<vmem>>, vector<1x1024xf32>
    %6 = vector.broadcast %5 : vector<1x1024xf32> to vector<16x1024xf32>
    %7 = arith.addf %4, %6 : vector<16x1024xf32>
    %cst_6 = arith.constant 0.000000e+00 : f32
    %8 = vector.broadcast %cst_6 : f32 to vector<16x1024xf32>
    %9 = arith.maximumf %7, %8 : vector<16x1024xf32>
    %10 = vector.extract_strided_slice %9 {offsets = [0, 0], sizes = [16, 512], strides = [1, 1]} : vector<16x1024xf32> to vector<16x512xf32>
    %11 = arith.truncf %10 : vector<16x512xf32> to vector<16x512xbf16>
    %12 = vector.extract_strided_slice %9 {offsets = [0, 512], sizes = [16, 512], strides = [1, 1]} : vector<16x1024xf32> to vector<16x512xf32>
    %13 = arith.truncf %12 : vector<16x512xf32> to vector<16x512xbf16>
    %c0_7 = arith.constant 0 : index
    %c0_8 = arith.constant 0 : index
    %14 = vector.load %arg4[%c0_7, %c0_8] : memref<512x128xbf16, #tpu.memory_space<vmem>>, vector<512x128xbf16>
    %cst_9 = arith.constant dense<0.000000e+00> : vector<16x128xf32>
    %15 = tpu.matmul %11, %14, %cst_9 {dimension_numbers = #tpu.dot_dimension_numbers<[1], [0], [0], [1], [0, 0, 1, 1], [], []>} : vector<16x512xbf16>, vector<512x128xbf16>, vector<16x128xf32> -> vector<16x128xf32>
    %c0_10 = arith.constant 0 : index
    %c0_11 = arith.constant 0 : index
    %16 = vector.load %arg5[%c0_10, %c0_11] : memref<1x128xf32, #tpu.memory_space<vmem>>, vector<1x128xf32>
    %17 = vector.broadcast %16 : vector<1x128xf32> to vector<16x128xf32>
    %18 = arith.addf %15, %17 : vector<16x128xf32>
    %19 = arith.mulf %18, %18 : vector<16x128xf32>
    %cst_12 = arith.constant dense<0.000000e+00> : vector<16xf32>
    %20 = vector.multi_reduction <add>, %19, %cst_12 [1] : vector<16x128xf32> to vector<16xf32>
    %21 = vector.shape_cast %20 : vector<16xf32> to vector<16x1xf32>
    %cst_13 = arith.constant 1.000000e-24 : f32
    %22 = vector.broadcast %cst_13 : f32 to vector<16x1xf32>
    %23 = arith.maximumf %21, %22 : vector<16x1xf32>
    %24 = math.rsqrt %23 : vector<16x1xf32>
    %25 = vector.broadcast %24 : vector<16x1xf32> to vector<16x128xf32>
    %26 = arith.mulf %18, %25 : vector<16x128xf32>
    %c0_14 = arith.constant 0 : index
    %c0_15 = arith.constant 0 : index
    %27 = vector.load %arg8[%c0_14, %c0_15] : memref<16x256xf32, #tpu.memory_space<vmem>>, vector<16x128xf32>
    tpu.vector_store %arg8[%c0_14, %c0_15], %26 {strides = array<i32>} : memref<16x256xf32, #tpu.memory_space<vmem>>, vector<16x128xf32>,
    %c0_16 = arith.constant 0 : index
    %c0_17 = arith.constant 0 : index
    %28 = vector.load %arg6[%c0_16, %c0_17] : memref<512x128xbf16, #tpu.memory_space<vmem>>, vector<512x128xbf16>
    %cst_18 = arith.constant dense<0.000000e+00> : vector<16x128xf32>
    %29 = tpu.matmul %13, %28, %cst_18 {dimension_numbers = #tpu.dot_dimension_numbers<[1], [0], [0], [1], [0, 0, 1, 1], [], []>} : vector<16x512xbf16>, vector<512x128xbf16>, vector<16x128xf32> -> vector<16x128xf32>
    %c0_19 = arith.constant 0 : index
    %c0_20 = arith.constant 0 : index
    %30 = vector.load %arg7[%c0_19, %c0_20] : memref<1x128xf32, #tpu.memory_space<vmem>>, vector<1x128xf32>
    %31 = vector.broadcast %30 : vector<1x128xf32> to vector<16x128xf32>
    %32 = arith.addf %29, %31 : vector<16x128xf32>
    %c0_21 = arith.constant 0 : index
    %c128 = arith.constant 128 : index
    %33 = vector.load %arg8[%c0_21, %c128] : memref<16x256xf32, #tpu.memory_space<vmem>>, vector<16x128xf32>
    tpu.vector_store %arg8[%c0_21, %c128], %32 {strides = array<i32>} : memref<16x256xf32, #tpu.memory_space<vmem>>, vector<16x128xf32>,
    return
  }
  func.func @transform_0(%arg0: i32) -> (i32, i32) {
    %c0_i32 = arith.constant 0 : i32
    %c0_i32_0 = arith.constant 0 : i32
    return %arg0, %c0_i32 : i32, i32
  }
  func.func @transform_1(%arg0: i32) -> (i32, i32) {
    %c0_i32 = arith.constant 0 : i32
    %c0_i32_0 = arith.constant 0 : i32
    %c0_i32_1 = arith.constant 0 : i32
    return %c0_i32, %c0_i32_0 : i32, i32
  }
  func.func @transform_2(%arg0: i32) -> (i32, i32) {
    %c0_i32 = arith.constant 0 : i32
    %c0_i32_0 = arith.constant 0 : i32
    %c0_i32_1 = arith.constant 0 : i32
    return %c0_i32, %c0_i32_0 : i32, i32
  }
  func.func @transform_3(%arg0: i32) -> (i32, i32) {
    %c0_i32 = arith.constant 0 : i32
    %c0_i32_0 = arith.constant 0 : i32
    %c0_i32_1 = arith.constant 0 : i32
    return %c0_i32, %c0_i32_0 : i32, i32
  }
  func.func @transform_4(%arg0: i32) -> (i32, i32) {
    %c0_i32 = arith.constant 0 : i32
    %c0_i32_0 = arith.constant 0 : i32
    %c0_i32_1 = arith.constant 0 : i32
    return %c0_i32, %c0_i32_0 : i32, i32
  }
  func.func @transform_5(%arg0: i32) -> (i32, i32) {
    %c0_i32 = arith.constant 0 : i32
    %c0_i32_0 = arith.constant 0 : i32
    %c0_i32_1 = arith.constant 0 : i32
    return %c0_i32, %c0_i32_0 : i32, i32
  }
  func.func @transform_6(%arg0: i32) -> (i32, i32) {
    %c0_i32 = arith.constant 0 : i32
    %c0_i32_0 = arith.constant 0 : i32
    %c0_i32_1 = arith.constant 0 : i32
    return %c0_i32, %c0_i32_0 : i32, i32
  }
  func.func @transform_7(%arg0: i32) -> (i32, i32) {
    %c0_i32 = arith.constant 0 : i32
    %c0_i32_0 = arith.constant 0 : i32
    return %arg0, %c0_i32 : i32, i32
  }
}

</mosaic_0001>

<llo_original>
// kernel: tpu_custom_call.1
$region0: #{tpu_custom_call.1}
  #allocation0 [shape = 'u32[]', space=smem, size = 0x4, offset = 0x4, fixed_abs, tag = 'smem constant byte address 0x4 - core index']
  #allocation1 [shape = 'u32[144,128]{1,0:T(1,128)}', space=vmem, size = 0x12000, scoped, tag = 'internal scratch']
  %s0 = inlined_call_operand.hbm [shape: bf16[16,512], index: 0, kind: input, shape index: {}]
  %s1 = inlined_call_operand.hbm [shape: bf16[512,1024], index: 1, kind: input, shape index: {}]
  %s2 = inlined_call_operand.hbm [shape: f32[1,1024], index: 2, kind: input, shape index: {}]
  %s3 = inlined_call_operand.hbm [shape: bf16[512,128], index: 3, kind: input, shape index: {}]
  %s4 = inlined_call_operand.vmem [shape: f32[1,128], index: 4, kind: input, shape index: {}]
  %s5 = inlined_call_operand.hbm [shape: bf16[512,128], index: 5, kind: input, shape index: {}]
  %s6 = inlined_call_operand.vmem [shape: f32[1,128], index: 6, kind: input, shape index: {}]
  %s7 = inlined_call_operand.hbm [shape: f32[16,256], index: 7, kind: output, shape index: {}]
  %s8 = sld [smem:[#allocation0]]
  $region58: #{tpu_custom_call.1} parent=0
    _
  %s10 = ssub.s32 1, %s8
  %s11 = scalar_select 0, %s10, %s8
  $region1: #{tpu_custom_call.1} parent=0
    #allocation2 [shape = 'u8[16384]{0}', space=vmem, size = 0x4000, scoped, tag = 'input window, operand 0, single buffered']
    #allocation3 [shape = 's32[1]{0}', space=sflag, size = 0x4, scoped, tag = 'scoped memory for tpu_custom_call.1']
    #allocation4 [shape = 's32[1]{0}', space=sflag, size = 0x4, scoped, tag = 'scoped memory for tpu_custom_call.1']
    #allocation5 [shape = 'u8[1048576]{0}', space=vmem, size = 0x100000, scoped, tag = 'input window, operand 1, single buffered']
    #allocation6 [shape = 's32[1]{0}', space=sflag, size = 0x4, scoped, tag = 'scoped memory for tpu_custom_call.1']
    #allocation7 [shape = 'u8[4096]{0}', space=vmem, size = 0x1000, scoped, tag = 'input window, operand 2, single buffered']
    #allocation8 [shape = 'u8[131072]{0}', space=vmem, size = 0x20000, scoped, tag = 'input window, operand 3, single buffered']
    #allocation9 [shape = 's32[1]{0}', space=sflag, size = 0x4, scoped, tag = 'scoped memory for tpu_custom_call.1']
    #allocation10 [shape = 'u8[131072]{0}', space=vmem, size = 0x20000, scoped, tag = 'input window, operand 5, single buffered']
    #allocation11 [shape = 'u8[16384]{0}', space=vmem, size = 0x4000, scoped, tag = 'output window, operand 0, single buffered']
    %12 = vsyncpa [#allocation3], 0
    %13 = vsyncpa [#allocation6], 0
    %14 = vsyncpa [#allocation9], 0
    %15 = vsyncpa [#allocation4], 0
    // Predicated region
    $region2: #{tpu_custom_call.1} parent=1 // pred_check
      _
    $region3: #{tpu_custom_call.1} parent=1 // pred_check_branch
      %17 = sbr.rel (0) target = $region5
    $region4: #{tpu_custom_call.1} parent=1 // pred_region
      %s19 = ssub.s32 512, 512
      %20 = vsyncadd [#allocation3], %s19
      %s21 = sshll.u32 [#allocation2], 4
      %s22 = int_to_ptr.vmem [resolvable:$true] %s21
      %27 = dma.hbm_to_vmem [thread:$0]  %s0, 512, %s22, [#allocation3], 256, 256, 16
    $region5: #{tpu_custom_call.1} parent=1 // pred_fallthru
      _
    // Predicated region
    $region6: #{tpu_custom_call.1} parent=1 // pred_check
      _
    $region7: #{tpu_custom_call.1} parent=1 // pred_check_branch
      %29 = sbr.rel (0) target = $region9
    $region8: #{tpu_custom_call.1} parent=1 // pred_region
      %s31 = ssub.s32 32768, 32768
      %32 = vsyncadd [#allocation6], %s31
      %s33 = sshll.u32 [#allocation5], 4
      %s34 = int_to_ptr.vmem [resolvable:$true] %s33
      %39 = dma.hbm_to_vmem [thread:$0]  %s1, 32768, %s34, [#allocation6], 512, 512, 32
    $region9: #{tpu_custom_call.1} parent=1 // pred_fallthru
      _
    // Predicated region
    $region10: #{tpu_custom_call.1} parent=1 // pred_check
      _
    $region11: #{tpu_custom_call.1} parent=1 // pred_check_branch
      %41 = sbr.rel (0) target = $region13
    $region12: #{tpu_custom_call.1} parent=1 // pred_region
      %s43 = ssub.s32 128, 128
      %44 = vsyncadd [#allocation6], %s43
      %s46 = sshll.u32 [#allocation7], 4
      %s47 = int_to_ptr.vmem [resolvable:$true] %s46
      %49 = dma.hbm_to_vmem [thread:$0]  %s2, 128, %s47, [#allocation6]
    $region13: #{tpu_custom_call.1} parent=1 // pred_fallthru
      _
    // Predicated region
    $region14: #{tpu_custom_call.1} parent=1 // pred_check
      _
    $region15: #{tpu_custom_call.1} parent=1 // pred_check_branch
      %51 = sbr.rel (0) target = $region17
    $region16: #{tpu_custom_call.1} parent=1 // pred_region
      %s53 = ssub.s32 4096, 4096
      %54 = vsyncadd [#allocation9], %s53
      %s55 = sshll.u32 [#allocation8], 4
      %s56 = int_to_ptr.vmem [resolvable:$true] %s55
      %61 = dma.hbm_to_vmem [thread:$0]  %s3, 4096, %s56, [#allocation9], 64, 64, 4
    $region17: #{tpu_custom_call.1} parent=1 // pred_fallthru
      _
    // Predicated region
    $region18: #{tpu_custom_call.1} parent=1 // pred_check
      _
    $region19: #{tpu_custom_call.1} parent=1 // pred_check_branch
      %63 = sbr.rel (0) target = $region21
    $region20: #{tpu_custom_call.1} parent=1 // pred_region
      _
    $region21: #{tpu_custom_call.1} parent=1 // pred_fallthru
      _
    // Predicated region
    $region22: #{tpu_custom_call.1} parent=1 // pred_check
      _
    $region23: #{tpu_custom_call.1} parent=1 // pred_check_branch
      %65 = sbr.rel (0) target = $region25
    $region24: #{tpu_custom_call.1} parent=1 // pred_region
      %s67 = ssub.s32 4096, 4096
      %68 = vsyncadd [#allocation9], %s67
      %s69 = sshll.u32 [#allocation10], 4
      %s70 = int_to_ptr.vmem [resolvable:$true] %s69
      %75 = dma.hbm_to_vmem [thread:$0]  %s5, 4096, %s70, [#allocation9], 64, 64, 4
    $region25: #{tpu_custom_call.1} parent=1 // pred_fallthru
      _
    // Predicated region
    $region26: #{tpu_custom_call.1} parent=1 // pred_check
      _
    $region27: #{tpu_custom_call.1} parent=1 // pred_check_branch
      %77 = sbr.rel (0) target = $region29
    $region28: #{tpu_custom_call.1} parent=1 // pred_region
      _
    $region29: #{tpu_custom_call.1} parent=1 // pred_fallthru
      _
    // Predicated region
    $region30: #{tpu_custom_call.1} parent=1 // pred_check
      _
    $region31: #{tpu_custom_call.1} parent=1 // pred_check_branch
      %79 = sbr.rel (0) target = $region33
    $region32: #{tpu_custom_call.1} parent=1 // pred_region
      %80 = dma.done [#allocation3], 512
    $region33: #{tpu_custom_call.1} parent=1 // pred_fallthru
      _
    // Predicated region
    $region34: #{tpu_custom_call.1} parent=1 // pred_check
      _
    $region35: #{tpu_custom_call.1} parent=1 // pred_check_branch
      %82 = sbr.rel (0) target = $region37
    $region36: #{tpu_custom_call.1} parent=1 // pred_region
      %83 = dma.done [#allocation6], 32768
    $region37: #{tpu_custom_call.1} parent=1 // pred_fallthru
      _
    // Predicated region
    $region38: #{tpu_custom_call.1} parent=1 // pred_check
      _
    $region39: #{tpu_custom_call.1} parent=1 // pred_check_branch
      %85 = sbr.rel (0) target = $region41
    $region40: #{tpu_custom_call.1} parent=1 // pred_region
      %86 = dma.done [#allocation6], 128
    $region41: #{tpu_custom_call.1} parent=1 // pred_fallthru
      _
    // Predicated region
    $region42: #{tpu_custom_call.1} parent=1 // pred_check
      _
    $region43: #{tpu_custom_call.1} parent=1 // pred_check_branch
      %88 = sbr.rel (0) target = $region45
    $region44: #{tpu_custom_call.1} parent=1 // pred_region
      %89 = dma.done [#allocation9], 4096
    $region45: #{tpu_custom_call.1} parent=1 // pred_fallthru
      _
    // Predicated region
    $region46: #{tpu_custom_call.1} parent=1 // pred_check
      _
    $region47: #{tpu_custom_call.1} parent=1 // pred_check_branch
      %91 = sbr.rel (0) target = $region49
    $region48: #{tpu_custom_call.1} parent=1 // pred_region
      %92 = dma.done [#allocation9], 4096
    $region49: #{tpu_custom_call.1} parent=1 // pred_fallthru
      _
    %v94 = vld [vmem:[#allocation2] sm:$0xff]
    %v95 = vld [vmem:[#allocation2 + $0x8] sm:$0xff]
    %v96 = vld [vmem:[#allocation2 + $0x10] sm:$0xff]
    %v97 = vld [vmem:[#allocation2 + $0x18] sm:$0xff]
    %v98 = vmax.bf16 %v94, 0
    %v99 = vmax.bf16 %v95, 0
    %v100 = vmax.bf16 %v96, 0
    %v101 = vmax.bf16 %v97, 0
    %v102 = vld [vmem:[#allocation5] sm:$0xff]
    %v103 = vld [vmem:[#allocation5 + $0x8] sm:$0xff]
    %v104 = vld [vmem:[#allocation5 + $0x10] sm:$0xff]
    %v105 = vld [vmem:[#allocation5 + $0x18] sm:$0xff]
    %v106 = vld [vmem:[#allocation5 + $0x20] sm:$0xff]
    %v107 = vld [vmem:[#allocation5 + $0x28] sm:$0xff]
    %v108 = vld [vmem:[#allocation5 + $0x30] sm:$0xff]
    %v109 = vld [vmem:[#allocation5 + $0x38] sm:$0xff]
    %v110 = vld [vmem:[#allocation5 + $0x40] sm:$0xff]
    %v111 = vld [vmem:[#allocation5 + $0x48] sm:$0xff]
    %v112 = vld [vmem:[#allocation5 + $0x50] sm:$0xff]
    %v113 = vld [vmem:[#allocation5 + $0x58] sm:$0xff]
    %v114 = vld [vmem:[#allocation5 + $0x60] sm:$0xff]
    %v115 = vld [vmem:[#allocation5 + $0x68] sm:$0xff]
    %v116 = vld [vmem:[#allocation5 + $0x70] sm:$0xff]
    %v117 = vld [vmem:[#allocation5 + $0x78] sm:$0xff]
    %v118 = vld [vmem:[#allocation5 + $0x80] sm:$0xff]
    %v119 = vld [vmem:[#allocation5 + $0x88] sm:$0xff]
    %v120 = vld [vmem:[#allocation5 + $0x90] sm:$0xff]
    %v121 = vld [vmem:[#allocation5 + $0x98] sm:$0xff]
    %v122 = vld [vmem:[#allocation5 + $0xa0] sm:$0xff]
    %v123 = vld [vmem:[#allocation5 + $0xa8] sm:$0xff]
    %v124 = vld [vmem:[#allocation5 + $0xb0] sm:$0xff]
    %v125 = vld [vmem:[#allocation5 + $0xb8] sm:$0xff]
    %v126 = vld [vmem:[#allocation5 + $0xc0] sm:$0xff]
    %v127 = vld [vmem:[#allocation5 + $0xc8] sm:$0xff]
    %v128 = vld [vmem:[#allocation5 + $0xd0] sm:$0xff]
    %v129 = vld [vmem:[#allocation5 + $0xd8] sm:$0xff]
    %v130 = vld [vmem:[#allocation5 + $0xe0] sm:$0xff]
    %v131 = vld [vmem:[#allocation5 + $0xe8] sm:$0xff]
    %v132 = vld [vmem:[#allocation5 + $0xf0] sm:$0xff]
    %v133 = vld [vmem:[#allocation5 + $0xf8] sm:$0xff]
    %v134 = vld [vmem:[#allocation5 + $0x100] sm:$0xff]
    %v135 = vld [vmem:[#allocation5 + $0x108] sm:$0xff]
    %v136 = vld [vmem:[#allocation5 + $0x110] sm:$0xff]
    %v137 = vld [vmem:[#allocation5 + $0x118] sm:$0xff]
    %v138 = vld [vmem:[#allocation5 + $0x120] sm:$0xff]
    %v139 = vld [vmem:[#allocation5 + $0x128] sm:$0xff]
    %v140 = vld [vmem:[#allocation5 + $0x130] sm:$0xff]
    %v141 = vld [vmem:[#allocation5 + $0x138] sm:$0xff]
    %v142 = vld [vmem:[#allocation5 + $0x140] sm:$0xff]
    %v143 = vld [vmem:[#allocation5 + $0x148] sm:$0xff]
    %v144 = vld [vmem:[#allocation5 + $0x150] sm:$0xff]
    %v145 = vld [vmem:[#allocation5 + $0x158] sm:$0xff]
    %v146 = vld [vmem:[#allocation5 + $0x160] sm:$0xff]
    %v147 = vld [vmem:[#allocation5 + $0x168] sm:$0xff]
    %v148 = vld [vmem:[#allocation5 + $0x170] sm:$0xff]
    %v149 = vld [vmem:[#allocation5 + $0x178] sm:$0xff]
    %v150 = vld [vmem:[#allocation5 + $0x180] sm:$0xff]
    %v151 = vld [vmem:[#allocation5 + $0x188] sm:$0xff]
    %v152 = vld [vmem:[#allocation5 + $0x190] sm:$0xff]
    %v153 = vld [vmem:[#allocation5 + $0x198] sm:$0xff]
    %v154 = vld [vmem:[#allocation5 + $0x1a0] sm:$0xff]
    %v155 = vld [vmem:[#allocation5 + $0x1a8] sm:$0xff]
    %v156 = vld [vmem:[#allocation5 + $0x1b0] sm:$0xff]
    %v157 = vld [vmem:[#allocation5 + $0x1b8] sm:$0xff]
    %v158 = vld [vmem:[#allocation5 + $0x1c0] sm:$0xff]
    %v159 = vld [vmem:[#allocation5 + $0x1c8] sm:$0xff]
    %v160 = vld [vmem:[#allocation5 + $0x1d0] sm:$0xff]
    %v161 = vld [vmem:[#allocation5 + $0x1d8] sm:$0xff]
    %v162 = vld [vmem:[#allocation5 + $0x1e0] sm:$0xff]
    %v163 = vld [vmem:[#allocation5 + $0x1e8] sm:$0xff]
    %v164 = vld [vmem:[#allocation5 + $0x1f0] sm:$0xff]
    %v165 = vld [vmem:[#allocation5 + $0x1f8] sm:$0xff]
    %v166 = vld [vmem:[#allocation5 + $0x200] sm:$0xff]
    %v167 = vld [vmem:[#allocation5 + $0x208] sm:$0xff]
    %v168 = vld [vmem:[#allocation5 + $0x210] sm:$0xff]
    %v169 = vld [vmem:[#allocation5 + $0x218] sm:$0xff]
    %v170 = vld [vmem:[#allocation5 + $0x220] sm:$0xff]
    %v171 = vld [vmem:[#allocation5 + $0x228] sm:$0xff]
    %v172 = vld [vmem:[#allocation5 + $0x230] sm:$0xff]
    %v173 = vld [vmem:[#allocation5 + $0x238] sm:$0xff]
    %v174 = vld [vmem:[#allocation5 + $0x240] sm:$0xff]
    %v175 = vld [vmem:[#allocation5 + $0x248] sm:$0xff]
    %v176 = vld [vmem:[#allocation5 + $0x250] sm:$0xff]
    %v177 = vld [vmem:[#allocation5 + $0x258] sm:$0xff]
    %v178 = vld [vmem:[#allocation5 + $0x260] sm:$0xff]
    %v179 = vld [vmem:[#allocation5 + $0x268] sm:$0xff]
    %v180 = vld [vmem:[#allocation5 + $0x270] sm:$0xff]
    %v181 = vld [vmem:[#allocation5 + $0x278] sm:$0xff]
    %v182 = vld [vmem:[#allocation5 + $0x280] sm:$0xff]
    %v183 = vld [vmem:[#allocation5 + $0x288] sm:$0xff]
    %v184 = vld [vmem:[#allocation5 + $0x290] sm:$0xff]
    %v185 = vld [vmem:[#allocation5 + $0x298] sm:$0xff]
    %v186 = vld [vmem:[#allocation5 + $0x2a0] sm:$0xff]
    %v187 = vld [vmem:[#allocation5 + $0x2a8] sm:$0xff]
    %v188 = vld [vmem:[#allocation5 + $0x2b0] sm:$0xff]
    %v189 = vld [vmem:[#allocation5 + $0x2b8] sm:$0xff]
    %v190 = vld [vmem:[#allocation5 + $0x2c0] sm:$0xff]
    %v191 = vld [vmem:[#allocation5 + $0x2c8] sm:$0xff]
    %v192 = vld [vmem:[#allocation5 + $0x2d0] sm:$0xff]
    %v193 = vld [vmem:[#allocation5 + $0x2d8] sm:$0xff]
    %v194 = vld [vmem:[#allocation5 + $0x2e0] sm:$0xff]
    %v195 = vld [vmem:[#allocation5 + $0x2e8] sm:$0xff]
    %v196 = vld [vmem:[#allocation5 + $0x2f0] sm:$0xff]
    %v197 = vld [vmem:[#allocation5 + $0x2f8] sm:$0xff]
    %v198 = vld [vmem:[#allocation5 + $0x300] sm:$0xff]
    %v199 = vld [vmem:[#allocation5 + $0x308] sm:$0xff]
    %v200 = vld [vmem:[#allocation5 + $0x310] sm:$0xff]
    %v201 = vld [vmem:[#allocation5 + $0x318] sm:$0xff]
    %v202 = vld [vmem:[#allocation5 + $0x320] sm:$0xff]
    %v203 = vld [vmem:[#allocation5 + $0x328] sm:$0xff]
    %v204 = vld [vmem:[#allocation5 + $0x330] sm:$0xff]
    %v205 = vld [vmem:[#allocation5 + $0x338] sm:$0xff]
    %v206 = vld [vmem:[#allocation5 + $0x340] sm:$0xff]
    %v207 = vld [vmem:[#allocation5 + $0x348] sm:$0xff]
    %v208 = vld [vmem:[#allocation5 + $0x350] sm:$0xff]
    %v209 = vld [vmem:[#allocation5 + $0x358] sm:$0xff]
    %v210 = vld [vmem:[#allocation5 + $0x360] sm:$0xff]
    %v211 = vld [vmem:[#allocation5 + $0x368] sm:$0xff]
    %v212 = vld [vmem:[#allocation5 + $0x370] sm:$0xff]
    %v213 = vld [vmem:[#allocation5 + $0x378] sm:$0xff]
    %v214 = vld [vmem:[#allocation5 + $0x380] sm:$0xff]
    %v215 = vld [vmem:[#allocation5 + $0x388] sm:$0xff]
    %v216 = vld [vmem:[#allocation5 + $0x390] sm:$0xff]
    %v217 = vld [vmem:[#allocation5 + $0x398] sm:$0xff]
    %v218 = vld [vmem:[#allocation5 + $0x3a0] sm:$0xff]
    %v219 = vld [vmem:[#allocation5 + $0x3a8] sm:$0xff]
    %v220 = vld [vmem:[#allocation5 + $0x3b0] sm:$0xff]
    %v221 = vld [vmem:[#allocation5 + $0x3b8] sm:$0xff]
    %v222 = vld [vmem:[#allocation5 + $0x3c0] sm:$0xff]
    %v223 = vld [vmem:[#allocation5 + $0x3c8] sm:$0xff]
    %v224 = vld [vmem:[#allocation5 + $0x3d0] sm:$0xff]
    %v225 = vld [vmem:[#allocation5 + $0x3d8] sm:$0xff]
    %v226 = vld [vmem:[#allocation5 + $0x3e0] sm:$0xff]
    %v227 = vld [vmem:[#allocation5 + $0x3e8] sm:$0xff]
    %v228 = vld [vmem:[#allocation5 + $0x3f0] sm:$0xff]
    %v229 = vld [vmem:[#allocation5 + $0x3f8] sm:$0xff]
    %v230 = vld [vmem:[#allocation5 + $0x400] sm:$0xff]
    %v231 = vld [vmem:[#allocation5 + $0x408] sm:$0xff]
    %v232 = vld [vmem:[#allocation5 + $0x410] sm:$0xff]
    %v233 = vld [vmem:[#allocation5 + $0x418] sm:$0xff]
    %v234 = vld [vmem:[#allocation5 + $0x420] sm:$0xff]
    %v235 = vld [vmem:[#allocation5 + $0x428] sm:$0xff]
    %v236 = vld [vmem:[#allocation5 + $0x430] sm:$0xff]
    %v237 = vld [vmem:[#allocation5 + $0x438] sm:$0xff]
    %v238 = vld [vmem:[#allocation5 + $0x440] sm:$0xff]
    %v239 = vld [vmem:[#allocation5 + $0x448] sm:$0xff]
    %v240 = vld [vmem:[#allocation5 + $0x450] sm:$0xff]
    %v241 = vld [vmem:[#allocation5 + $0x458] sm:$0xff]
    %v242 = vld [vmem:[#allocation5 + $0x460] sm:$0xff]
    %v243 = vld [vmem:[#allocation5 + $0x468] sm:$0xff]
    %v244 = vld [vmem:[#allocation5 + $0x470] sm:$0xff]
    %v245 = vld [vmem:[#allocation5 + $0x478] sm:$0xff]
    %v246 = vld [vmem:[#allocation5 + $0x480] sm:$0xff]
    %v247 = vld [vmem:[#allocation5 + $0x488] sm:$0xff]
    %v248 = vld [vmem:[#allocation5 + $0x490] sm:$0xff]
    %v249 = vld [vmem:[#allocation5 + $0x498] sm:$0xff]
    %v250 = vld [vmem:[#allocation5 + $0x4a0] sm:$0xff]
    %v251 = vld [vmem:[#allocation5 + $0x4a8] sm:$0xff]
    %v252 = vld [vmem:[#allocation5 + $0x4b0] sm:$0xff]
    %v253 = vld [vmem:[#allocation5 + $0x4b8] sm:$0xff]
    %v254 = vld [vmem:[#allocation5 + $0x4c0] sm:$0xff]
    %v255 = vld [vmem:[#allocation5 + $0x4c8] sm:$0xff]
    %v256 = vld [vmem:[#allocation5 + $0x4d0] sm:$0xff]
    %v257 = vld [vmem:[#allocation5 + $0x4d8] sm:$0xff]
    %v258 = vld [vmem:[#allocation5 + $0x4e0] sm:$0xff]
    %v259 = vld [vmem:[#allocation5 + $0x4e8] sm:$0xff]
    %v260 = vld [vmem:[#allocation5 + $0x4f0] sm:$0xff]
    %v261 = vld [vmem:[#allocation5 + $0x4f8] sm:$0xff]
    %v262 = vld [vmem:[#allocation5 + $0x500] sm:$0xff]
    %v263 = vld [vmem:[#allocation5 + $0x508] sm:$0xff]
    %v264 = vld [vmem:[#allocation5 + $0x510] sm:$0xff]
    %v265 = vld [vmem:[#allocation5 + $0x518] sm:$0xff]
    %v266 = vld [vmem:[#allocation5 + $0x520] sm:$0xff]
    %v267 = vld [vmem:[#allocation5 + $0x528] sm:$0xff]
    %v268 = vld [vmem:[#allocation5 + $0x530] sm:$0xff]
    %v269 = vld [vmem:[#allocation5 + $0x538] sm:$0xff]
    %v270 = vld [vmem:[#allocation5 + $0x540] sm:$0xff]
    %v271 = vld [vmem:[#allocation5 + $0x548] sm:$0xff]
    %v272 = vld [vmem:[#allocation5 + $0x550] sm:$0xff]
    %v273 = vld [vmem:[#allocation5 + $0x558] sm:$0xff]
    %v274 = vld [vmem:[#allocation5 + $0x560] sm:$0xff]
    %v275 = vld [vmem:[#allocation5 + $0x568] sm:$0xff]
    %v276 = vld [vmem:[#allocation5 + $0x570] sm:$0xff]
    %v277 = vld [vmem:[#allocation5 + $0x578] sm:$0xff]
    %v278 = vld [vmem:[#allocation5 + $0x580] sm:$0xff]
    %v279 = vld [vmem:[#allocation5 + $0x588] sm:$0xff]
    %v280 = vld [vmem:[#allocation5 + $0x590] sm:$0xff]
    %v281 = vld [vmem:[#allocation5 + $0x598] sm:$0xff]
    %v282 = vld [vmem:[#allocation5 + $0x5a0] sm:$0xff]
    %v283 = vld [vmem:[#allocation5 + $0x5a8] sm:$0xff]
    %v284 = vld [vmem:[#allocation5 + $0x5b0] sm:$0xff]
    %v285 = vld [vmem:[#allocation5 + $0x5b8] sm:$0xff]
    %v286 = vld [vmem:[#allocation5 + $0x5c0] sm:$0xff]
    %v287 = vld [vmem:[#allocation5 + $0x5c8] sm:$0xff]
    %v288 = vld [vmem:[#allocation5 + $0x5d0] sm:$0xff]
    %v289 = vld [vmem:[#allocation5 + $0x5d8] sm:$0xff]
    %v290 = vld [vmem:[#allocation5 + $0x5e0] sm:$0xff]
    %v291 = vld [vmem:[#allocation5 + $0x5e8] sm:$0xff]
    %v292 = vld [vmem:[#allocation5 + $0x5f0] sm:$0xff]
    %v293 = vld [vmem:[#allocation5 + $0x5f8] sm:$0xff]
    %v294 = vld [vmem:[#allocation5 + $0x600] sm:$0xff]
    %v295 = vld [vmem:[#allocation5 + $0x608] sm:$0xff]
    %v296 = vld [vmem:[#allocation5 + $0x610] sm:$0xff]
    %v297 = vld [vmem:[#allocation5 + $0x618] sm:$0xff]
    %v298 = vld [vmem:[#allocation5 + $0x620] sm:$0xff]
    %v299 = vld [vmem:[#allocation5 + $0x628] sm:$0xff]
    %v300 = vld [vmem:[#allocation5 + $0x630] sm:$0xff]
    %v301 = vld [vmem:[#allocation5 + $0x638] sm:$0xff]
    %v302 = vld [vmem:[#allocation5 + $0x640] sm:$0xff]
    %v303 = vld [vmem:[#allocation5 + $0x648] sm:$0xff]
    %v304 = vld [vmem:[#allocation5 + $0x650] sm:$0xff]
    %v305 = vld [vmem:[#allocation5 + $0x658] sm:$0xff]
    %v306 = vld [vmem:[#allocation5 + $0x660] sm:$0xff]
    %v307 = vld [vmem:[#allocation5 + $0x668] sm:$0xff]
    %v308 = vld [vmem:[#allocation5 + $0x670] sm:$0xff]
    %v309 = vld [vmem:[#allocation5 + $0x678] sm:$0xff]
    %v310 = vld [vmem:[#allocation5 + $0x680] sm:$0xff]
    %v311 = vld [vmem:[#allocation5 + $0x688] sm:$0xff]
    %v312 = vld [vmem:[#allocation5 + $0x690] sm:$0xff]
    %v313 = vld [vmem:[#allocation5 + $0x698] sm:$0xff]
    %v314 = vld [vmem:[#allocation5 + $0x6a0] sm:$0xff]
    %v315 = vld [vmem:[#allocation5 + $0x6a8] sm:$0xff]
    %v316 = vld [vmem:[#allocation5 + $0x6b0] sm:$0xff]
    %v317 = vld [vmem:[#allocation5 + $0x6b8] sm:$0xff]
    %v318 = vld [vmem:[#allocation5 + $0x6c0] sm:$0xff]
    %v319 = vld [vmem:[#allocation5 + $0x6c8] sm:$0xff]
    %v320 = vld [vmem:[#allocation5 + $0x6d0] sm:$0xff]
    %v321 = vld [vmem:[#allocation5 + $0x6d8] sm:$0xff]
    %v322 = vld [vmem:[#allocation5 + $0x6e0] sm:$0xff]
    %v323 = vld [vmem:[#allocation5 + $0x6e8] sm:$0xff]
    %v324 = vld [vmem:[#allocation5 + $0x6f0] sm:$0xff]
    %v325 = vld [vmem:[#allocation5 + $0x6f8] sm:$0xff]
    %v326 = vld [vmem:[#allocation5 + $0x700] sm:$0xff]
    %v327 = vld [vmem:[#allocation5 + $0x708] sm:$0xff]
    %v328 = vld [vmem:[#allocation5 + $0x710] sm:$0xff]
    %v329 = vld [vmem:[#allocation5 + $0x718] sm:$0xff]
    %v330 = vld [vmem:[#allocation5 + $0x720] sm:$0xff]
    %v331 = vld [vmem:[#allocation5 + $0x728] sm:$0xff]
    %v332 = vld [vmem:[#allocation5 + $0x730] sm:$0xff]
    %v333 = vld [vmem:[#allocation5 + $0x738] sm:$0xff]
    %v334 = vld [vmem:[#allocation5 + $0x740] sm:$0xff]
    %v335 = vld [vmem:[#allocation5 + $0x748] sm:$0xff]
    %v336 = vld [vmem:[#allocation5 + $0x750] sm:$0xff]
    %v337 = vld [vmem:[#allocation5 + $0x758] sm:$0xff]
    %v338 = vld [vmem:[#allocation5 + $0x760] sm:$0xff]
    %v339 = vld [vmem:[#allocation5 + $0x768] sm:$0xff]
    %v340 = vld [vmem:[#allocation5 + $0x770] sm:$0xff]
    %v341 = vld [vmem:[#allocation5 + $0x778] sm:$0xff]
    %v342 = vld [vmem:[#allocation5 + $0x780] sm:$0xff]
    %v343 = vld [vmem:[#allocation5 + $0x788] sm:$0xff]
    %v344 = vld [vmem:[#allocation5 + $0x790] sm:$0xff]
    %v345 = vld [vmem:[#allocation5 + $0x798] sm:$0xff]
    %v346 = vld [vmem:[#allocation5 + $0x7a0] sm:$0xff]
    %v347 = vld [vmem:[#allocation5 + $0x7a8] sm:$0xff]
    %v348 = vld [vmem:[#allocation5 + $0x7b0] sm:$0xff]
    %v349 = vld [vmem:[#allocation5 + $0x7b8] sm:$0xff]
    %v350 = vld [vmem:[#allocation5 + $0x7c0] sm:$0xff]
    %v351 = vld [vmem:[#allocation5 + $0x7c8] sm:$0xff]
    %v352 = vld [vmem:[#allocation5 + $0x7d0] sm:$0xff]
    %v353 = vld [vmem:[#allocation5 + $0x7d8] sm:$0xff]
    %v354 = vld [vmem:[#allocation5 + $0x7e0] sm:$0xff]
    %v355 = vld [vmem:[#allocation5 + $0x7e8] sm:$0xff]
    %v356 = vld [vmem:[#allocation5 + $0x7f0] sm:$0xff]
    %v357 = vld [vmem:[#allocation5 + $0x7f8] sm:$0xff]
    %v358 = vld [vmem:[#allocation7] sm:$0xff]
    %v360 = vlaneseq
    %v361 = vshrl.u32 %v360, 7
    %v362 = vsub.s32 0, %v361
    %v363 = vrot.slane %v358, %v362
    %v364 = vlaneseq
    %v365 = vshrl.u32 %v364, 7
    %v366 = vsub.s32 1, %v365
    %v367 = vrot.slane %v358, %v366
    %v368 = vlaneseq
    %v369 = vshrl.u32 %v368, 7
    %v370 = vsub.s32 2, %v369
    %v371 = vrot.slane %v358, %v370
    %v372 = vlaneseq
    %v373 = vshrl.u32 %v372, 7
    %v374 = vsub.s32 3, %v373
    %v375 = vrot.slane %v358, %v374
    %v376 = vlaneseq
    %v377 = vshrl.u32 %v376, 7
    %v378 = vsub.s32 4, %v377
    %v379 = vrot.slane %v358, %v378
    %v380 = vlaneseq
    %v381 = vshrl.u32 %v380, 7
    %v382 = vsub.s32 5, %v381
    %v383 = vrot.slane %v358, %v382
    %v384 = vlaneseq
    %v385 = vshrl.u32 %v384, 7
    %v386 = vsub.s32 6, %v385
    %v387 = vrot.slane %v358, %v386
    %v388 = vlaneseq
    %v389 = vshrl.u32 %v388, 7
    %v390 = vsub.s32 7, %v389
    %v391 = vrot.slane %v358, %v390
    %v404 = vunpack.c.l.b16 %v98
    %v405 = vunpack.c.h.b16 %v98
    %v406 = vunpack.c.l.b16 %v99
    %v407 = vunpack.c.h.b16 %v99
    %v408 = vunpack.c.l.b16 %v100
    %v409 = vunpack.c.h.b16 %v100
    %v410 = vunpack.c.l.b16 %v101
    %v411 = vunpack.c.h.b16 %v101
    %v412 = vpack.c.b16 %v408, %v404
    %v413 = vpack.c.b16 %v409, %v405
    %v414 = vpack.c.b16 %v410, %v406
    %v415 = vpack.c.b16 %v411, %v407
    %v676 = vunpack.c.l.b16 %v102
    %v677 = vunpack.c.h.b16 %v102
    %v678 = vunpack.c.l.b16 %v103
    %v679 = vunpack.c.h.b16 %v103
    %v680 = vunpack.c.l.b16 %v104
    %v681 = vunpack.c.h.b16 %v104
    %v682 = vunpack.c.l.b16 %v105
    %v683 = vunpack.c.h.b16 %v105
    %v684 = vunpack.c.l.b16 %v106
    %v685 = vunpack.c.h.b16 %v106
    %v686 = vunpack.c.l.b16 %v107
    %v687 = vunpack.c.h.b16 %v107
    %v688 = vunpack.c.l.b16 %v108
    %v689 = vunpack.c.h.b16 %v108
    %v690 = vunpack.c.l.b16 %v109
    %v691 = vunpack.c.h.b16 %v109
    %v692 = vunpack.c.l.b16 %v110
    %v693 = vunpack.c.h.b16 %v110
    %v694 = vunpack.c.l.b16 %v111
    %v695 = vunpack.c.h.b16 %v111
    %v696 = vunpack.c.l.b16 %v112
    %v697 = vunpack.c.h.b16 %v112
    %v698 = vunpack.c.l.b16 %v113
    %v699 = vunpack.c.h.b16 %v113
    %v700 = vunpack.c.l.b16 %v114
    %v701 = vunpack.c.h.b16 %v114
    %v702 = vunpack.c.l.b16 %v115
    %v703 = vunpack.c.h.b16 %v115
    %v704 = vunpack.c.l.b16 %v116
    %v705 = vunpack.c.h.b16 %v116
    %v706 = vunpack.c.l.b16 %v117
    %v707 = vunpack.c.h.b16 %v117
    %v708 = vunpack.c.l.b16 %v118
    %v709 = vunpack.c.h.b16 %v118
    %v710 = vunpack.c.l.b16 %v119
    %v711 = vunpack.c.h.b16 %v119
    %v712 = vunpack.c.l.b16 %v120
    %v713 = vunpack.c.h.b16 %v120
    %v714 = vunpack.c.l.b16 %v121
    %v715 = vunpack.c.h.b16 %v121
    %v716 = vunpack.c.l.b16 %v122
    %v717 = vunpack.c.h.b16 %v122
    %v718 = vunpack.c.l.b16 %v123
    %v719 = vunpack.c.h.b16 %v123
    %v720 = vunpack.c.l.b16 %v124
    %v721 = vunpack.c.h.b16 %v124
    %v722 = vunpack.c.l.b16 %v125
    %v723 = vunpack.c.h.b16 %v125
    %v724 = vunpack.c.l.b16 %v126
    %v725 = vunpack.c.h.b16 %v126
    %v726 = vunpack.c.l.b16 %v127
    %v727 = vunpack.c.h.b16 %v127
    %v728 = vunpack.c.l.b16 %v128
    %v729 = vunpack.c.h.b16 %v128
    %v730 = vunpack.c.l.b16 %v129
    %v731 = vunpack.c.h.b16 %v129
    %v732 = vunpack.c.l.b16 %v130
    %v733 = vunpack.c.h.b16 %v130
    %v734 = vunpack.c.l.b16 %v131
    %v735 = vunpack.c.h.b16 %v131
    %v736 = vunpack.c.l.b16 %v132
    %v737 = vunpack.c.h.b16 %v132
    %v738 = vunpack.c.l.b16 %v133
    %v739 = vunpack.c.h.b16 %v133
    %v740 = vunpack.c.l.b16 %v134
    %v741 = vunpack.c.h.b16 %v134
    %v742 = vunpack.c.l.b16 %v135
    %v743 = vunpack.c.h.b16 %v135
    %v744 = vunpack.c.l.b16 %v136
    %v745 = vunpack.c.h.b16 %v136
    %v746 = vunpack.c.l.b16 %v137
    %v747 = vunpack.c.h.b16 %v137
    %v748 = vunpack.c.l.b16 %v138
    %v749 = vunpack.c.h.b16 %v138
    %v750 = vunpack.c.l.b16 %v139
    %v751 = vunpack.c.h.b16 %v139
    %v752 = vunpack.c.l.b16 %v140
    %v753 = vunpack.c.h.b16 %v140
    %v754 = vunpack.c.l.b16 %v141
    %v755 = vunpack.c.h.b16 %v141
    %v756 = vunpack.c.l.b16 %v142
    %v757 = vunpack.c.h.b16 %v142
    %v758 = vunpack.c.l.b16 %v143
    %v759 = vunpack.c.h.b16 %v143
    %v760 = vunpack.c.l.b16 %v144
    %v761 = vunpack.c.h.b16 %v144
    %v762 = vunpack.c.l.b16 %v145
    %v763 = vunpack.c.h.b16 %v145
    %v764 = vunpack.c.l.b16 %v146
    %v765 = vunpack.c.h.b16 %v146
    %v766 = vunpack.c.l.b16 %v147
    %v767 = vunpack.c.h.b16 %v147
    %v768 = vunpack.c.l.b16 %v148
    %v769 = vunpack.c.h.b16 %v148
    %v770 = vunpack.c.l.b16 %v149
    %v771 = vunpack.c.h.b16 %v149
    %v772 = vunpack.c.l.b16 %v150
    %v773 = vunpack.c.h.b16 %v150
    %v774 = vunpack.c.l.b16 %v151
    %v775 = vunpack.c.h.b16 %v151
    %v776 = vunpack.c.l.b16 %v152
    %v777 = vunpack.c.h.b16 %v152
    %v778 = vunpack.c.l.b16 %v153
    %v779 = vunpack.c.h.b16 %v153
    %v780 = vunpack.c.l.b16 %v154
    %v781 = vunpack.c.h.b16 %v154
    %v782 = vunpack.c.l.b16 %v155
    %v783 = vunpack.c.h.b16 %v155
    %v784 = vunpack.c.l.b16 %v156
    %v785 = vunpack.c.h.b16 %v156
    %v786 = vunpack.c.l.b16 %v157
    %v787 = vunpack.c.h.b16 %v157
    %v788 = vunpack.c.l.b16 %v158
    %v789 = vunpack.c.h.b16 %v158
    %v790 = vunpack.c.l.b16 %v159
    %v791 = vunpack.c.h.b16 %v159
    %v792 = vunpack.c.l.b16 %v160
    %v793 = vunpack.c.h.b16 %v160
    %v794 = vunpack.c.l.b16 %v161
    %v795 = vunpack.c.h.b16 %v161
    %v796 = vunpack.c.l.b16 %v162
    %v797 = vunpack.c.h.b16 %v162
    %v798 = vunpack.c.l.b16 %v163
    %v799 = vunpack.c.h.b16 %v163
    %v800 = vunpack.c.l.b16 %v164
    %v801 = vunpack.c.h.b16 %v164
    %v802 = vunpack.c.l.b16 %v165
    %v803 = vunpack.c.h.b16 %v165
    %v804 = vunpack.c.l.b16 %v166
    %v805 = vunpack.c.h.b16 %v166
    %v806 = vunpack.c.l.b16 %v167
    %v807 = vunpack.c.h.b16 %v167
    %v808 = vunpack.c.l.b16 %v168
    %v809 = vunpack.c.h.b16 %v168
    %v810 = vunpack.c.l.b16 %v169
    %v811 = vunpack.c.h.b16 %v169
    %v812 = vunpack.c.l.b16 %v170
    %v813 = vunpack.c.h.b16 %v170
    %v814 = vunpack.c.l.b16 %v171
    %v815 = vunpack.c.h.b16 %v171
    %v816 = vunpack.c.l.b16 %v172
    %v817 = vunpack.c.h.b16 %v172
    %v818 = vunpack.c.l.b16 %v173
    %v819 = vunpack.c.h.b16 %v173
    %v820 = vunpack.c.l.b16 %v174
    %v821 = vunpack.c.h.b16 %v174
    %v822 = vunpack.c.l.b16 %v175
    %v823 = vunpack.c.h.b16 %v175
    %v824 = vunpack.c.l.b16 %v176
    %v825 = vunpack.c.h.b16 %v176
    %v826 = vunpack.c.l.b16 %v177
    %v827 = vunpack.c.h.b16 %v177
    %v828 = vunpack.c.l.b16 %v178
    %v829 = vunpack.c.h.b16 %v178
    %v830 = vunpack.c.l.b16 %v179
    %v831 = vunpack.c.h.b16 %v179
    %v832 = vunpack.c.l.b16 %v180
    %v833 = vunpack.c.h.b16 %v180
    %v834 = vunpack.c.l.b16 %v181
    %v835 = vunpack.c.h.b16 %v181
    %v836 = vunpack.c.l.b16 %v182
    %v837 = vunpack.c.h.b16 %v182
    %v838 = vunpack.c.l.b16 %v183
    %v839 = vunpack.c.h.b16 %v183
    %v840 = vunpack.c.l.b16 %v184
    %v841 = vunpack.c.h.b16 %v184
    %v842 = vunpack.c.l.b16 %v185
    %v843 = vunpack.c.h.b16 %v185
    %v844 = vunpack.c.l.b16 %v186
    %v845 = vunpack.c.h.b16 %v186
    %v846 = vunpack.c.l.b16 %v187
    %v847 = vunpack.c.h.b16 %v187
    %v848 = vunpack.c.l.b16 %v188
    %v849 = vunpack.c.h.b16 %v188
    %v850 = vunpack.c.l.b16 %v189
    %v851 = vunpack.c.h.b16 %v189
    %v852 = vunpack.c.l.b16 %v190
    %v853 = vunpack.c.h.b16 %v190
    %v854 = vunpack.c.l.b16 %v191
    %v855 = vunpack.c.h.b16 %v191
    %v856 = vunpack.c.l.b16 %v192
    %v857 = vunpack.c.h.b16 %v192
    %v858 = vunpack.c.l.b16 %v193
    %v859 = vunpack.c.h.b16 %v193
    %v860 = vunpack.c.l.b16 %v194
    %v861 = vunpack.c.h.b16 %v194
    %v862 = vunpack.c.l.b16 %v195
    %v863 = vunpack.c.h.b16 %v195
    %v864 = vunpack.c.l.b16 %v196
    %v865 = vunpack.c.h.b16 %v196
    %v866 = vunpack.c.l.b16 %v197
    %v867 = vunpack.c.h.b16 %v197
    %v868 = vunpack.c.l.b16 %v198
    %v869 = vunpack.c.h.b16 %v198
    %v870 = vunpack.c.l.b16 %v199
    %v871 = vunpack.c.h.b16 %v199
    %v872 = vunpack.c.l.b16 %v200
    %v873 = vunpack.c.h.b16 %v200
    %v874 = vunpack.c.l.b16 %v201
    %v875 = vunpack.c.h.b16 %v201
    %v876 = vunpack.c.l.b16 %v202
    %v877 = vunpack.c.h.b16 %v202
    %v878 = vunpack.c.l.b16 %v203
    %v879 = vunpack.c.h.b16 %v203
    %v880 = vunpack.c.l.b16 %v204
    %v881 = vunpack.c.h.b16 %v204
    %v882 = vunpack.c.l.b16 %v205
    %v883 = vunpack.c.h.b16 %v205
    %v884 = vunpack.c.l.b16 %v206
    %v885 = vunpack.c.h.b16 %v206
    %v886 = vunpack.c.l.b16 %v207
    %v887 = vunpack.c.h.b16 %v207
    %v888 = vunpack.c.l.b16 %v208
    %v889 = vunpack.c.h.b16 %v208
    %v890 = vunpack.c.l.b16 %v209
    %v891 = vunpack.c.h.b16 %v209
    %v892 = vunpack.c.l.b16 %v210
    %v893 = vunpack.c.h.b16 %v210
    %v894 = vunpack.c.l.b16 %v211
    %v895 = vunpack.c.h.b16 %v211
    %v896 = vunpack.c.l.b16 %v212
    %v897 = vunpack.c.h.b16 %v212
    %v898 = vunpack.c.l.b16 %v213
    %v899 = vunpack.c.h.b16 %v213
    %v900 = vunpack.c.l.b16 %v214
    %v901 = vunpack.c.h.b16 %v214
    %v902 = vunpack.c.l.b16 %v215
    %v903 = vunpack.c.h.b16 %v215
    %v904 = vunpack.c.l.b16 %v216
    %v905 = vunpack.c.h.b16 %v216
    %v906 = vunpack.c.l.b16 %v217
    %v907 = vunpack.c.h.b16 %v217
    %v908 = vunpack.c.l.b16 %v218
    %v909 = vunpack.c.h.b16 %v218
    %v910 = vunpack.c.l.b16 %v219
    %v911 = vunpack.c.h.b16 %v219
    %v912 = vunpack.c.l.b16 %v220
    %v913 = vunpack.c.h.b16 %v220
    %v914 = vunpack.c.l.b16 %v221
    %v915 = vunpack.c.h.b16 %v221
    %v916 = vunpack.c.l.b16 %v222
    %v917 = vunpack.c.h.b16 %v222
    %v918 = vunpack.c.l.b16 %v223
    %v919 = vunpack.c.h.b16 %v223
    %v920 = vunpack.c.l.b16 %v224
    %v921 = vunpack.c.h.b16 %v224
    %v922 = vunpack.c.l.b16 %v225
    %v923 = vunpack.c.h.b16 %v225
    %v924 = vunpack.c.l.b16 %v226
    %v925 = vunpack.c.h.b16 %v226
    %v926 = vunpack.c.l.b16 %v227
    %v927 = vunpack.c.h.b16 %v227
    %v928 = vunpack.c.l.b16 %v228
    %v929 = vunpack.c.h.b16 %v228
    %v930 = vunpack.c.l.b16 %v229
    %v931 = vunpack.c.h.b16 %v229
    %v932 = vunpack.c.l.b16 %v230
    %v933 = vunpack.c.h.b16 %v230
    %v934 = vunpack.c.l.b16 %v231
    %v935 = vunpack.c.h.b16 %v231
    %v936 = vunpack.c.l.b16 %v232
    %v937 = vunpack.c.h.b16 %v232
    %v938 = vunpack.c.l.b16 %v233
    %v939 = vunpack.c.h.b16 %v233
    %v940 = vunpack.c.l.b16 %v234
    %v941 = vunpack.c.h.b16 %v234
    %v942 = vunpack.c.l.b16 %v235
    %v943 = vunpack.c.h.b16 %v235
    %v944 = vunpack.c.l.b16 %v236
    %v945 = vunpack.c.h.b16 %v236
    %v946 = vunpack.c.l.b16 %v237
    %v947 = vunpack.c.h.b16 %v237
    %v948 = vunpack.c.l.b16 %v238
    %v949 = vunpack.c.h.b16 %v238
    %v950 = vunpack.c.l.b16 %v239
    %v951 = vunpack.c.h.b16 %v239
    %v952 = vunpack.c.l.b16 %v240
    %v953 = vunpack.c.h.b16 %v240
    %v954 = vunpack.c.l.b16 %v241
    %v955 = vunpack.c.h.b16 %v241
    %v956 = vunpack.c.l.b16 %v242
    %v957 = vunpack.c.h.b16 %v242
    %v958 = vunpack.c.l.b16 %v243
    %v959 = vunpack.c.h.b16 %v243
    %v960 = vunpack.c.l.b16 %v244
    %v961 = vunpack.c.h.b16 %v244
    %v962 = vunpack.c.l.b16 %v245
    %v963 = vunpack.c.h.b16 %v245
    %v964 = vunpack.c.l.b16 %v246
    %v965 = vunpack.c.h.b16 %v246
    %v966 = vunpack.c.l.b16 %v247
    %v967 = vunpack.c.h.b16 %v247
    %v968 = vunpack.c.l.b16 %v248
    %v969 = vunpack.c.h.b16 %v248
    %v970 = vunpack.c.l.b16 %v249
    %v971 = vunpack.c.h.b16 %v249
    %v972 = vunpack.c.l.b16 %v250
    %v973 = vunpack.c.h.b16 %v250
    %v974 = vunpack.c.l.b16 %v251
    %v975 = vunpack.c.h.b16 %v251
    %v976 = vunpack.c.l.b16 %v252
    %v977 = vunpack.c.h.b16 %v252
    %v978 = vunpack.c.l.b16 %v253
    %v979 = vunpack.c.h.b16 %v253
    %v980 = vunpack.c.l.b16 %v254
    %v981 = vunpack.c.h.b16 %v254
    %v982 = vunpack.c.l.b16 %v255
    %v983 = vunpack.c.h.b16 %v255
    %v984 = vunpack.c.l.b16 %v256
    %v985 = vunpack.c.h.b16 %v256
    %v986 = vunpack.c.l.b16 %v257
    %v987 = vunpack.c.h.b16 %v257
    %v988 = vunpack.c.l.b16 %v258
    %v989 = vunpack.c.h.b16 %v258
    %v990 = vunpack.c.l.b16 %v259
    %v991 = vunpack.c.h.b16 %v259
    %v992 = vunpack.c.l.b16 %v260
    %v993 = vunpack.c.h.b16 %v260
    %v994 = vunpack.c.l.b16 %v261
    %v995 = vunpack.c.h.b16 %v261
    %v996 = vunpack.c.l.b16 %v262
    %v997 = vunpack.c.h.b16 %v262
    %v998 = vunpack.c.l.b16 %v263
    %v999 = vunpack.c.h.b16 %v263
    %v1000 = vunpack.c.l.b16 %v264
    %v1001 = vunpack.c.h.b16 %v264
    %v1002 = vunpack.c.l.b16 %v265
    %v1003 = vunpack.c.h.b16 %v265
    %v1004 = vunpack.c.l.b16 %v266
    %v1005 = vunpack.c.h.b16 %v266
    %v1006 = vunpack.c.l.b16 %v267
    %v1007 = vunpack.c.h.b16 %v267
    %v1008 = vunpack.c.l.b16 %v268
    %v1009 = vunpack.c.h.b16 %v268
    %v1010 = vunpack.c.l.b16 %v269
    %v1011 = vunpack.c.h.b16 %v269
    %v1012 = vunpack.c.l.b16 %v270
    %v1013 = vunpack.c.h.b16 %v270
    %v1014 = vunpack.c.l.b16 %v271
    %v1015 = vunpack.c.h.b16 %v271
    %v1016 = vunpack.c.l.b16 %v272
    %v1017 = vunpack.c.h.b16 %v272
    %v1018 = vunpack.c.l.b16 %v273
    %v1019 = vunpack.c.h.b16 %v273
    %v1020 = vunpack.c.l.b16 %v274
    %v1021 = vunpack.c.h.b16 %v274
    %v1022 = vunpack.c.l.b16 %v275
    %v1023 = vunpack.c.h.b16 %v275
    %v1024 = vunpack.c.l.b16 %v276
    %v1025 = vunpack.c.h.b16 %v276
    %v1026 = vunpack.c.l.b16 %v277
    %v1027 = vunpack.c.h.b16 %v277
    %v1028 = vunpack.c.l.b16 %v278
    %v1029 = vunpack.c.h.b16 %v278
    %v1030 = vunpack.c.l.b16 %v279
    %v1031 = vunpack.c.h.b16 %v279
    %v1032 = vunpack.c.l.b16 %v280
    %v1033 = vunpack.c.h.b16 %v280
    %v1034 = vunpack.c.l.b16 %v281
    %v1035 = vunpack.c.h.b16 %v281
    %v1036 = vunpack.c.l.b16 %v282
    %v1037 = vunpack.c.h.b16 %v282
    %v1038 = vunpack.c.l.b16 %v283
    %v1039 = vunpack.c.h.b16 %v283
    %v1040 = vunpack.c.l.b16 %v284
    %v1041 = vunpack.c.h.b16 %v284
    %v1042 = vunpack.c.l.b16 %v285
    %v1043 = vunpack.c.h.b16 %v285
    %v1044 = vunpack.c.l.b16 %v286
    %v1045 = vunpack.c.h.b16 %v286
    %v1046 = vunpack.c.l.b16 %v287
    %v1047 = vunpack.c.h.b16 %v287
    %v1048 = vunpack.c.l.b16 %v288
    %v1049 = vunpack.c.h.b16 %v288
    %v1050 = vunpack.c.l.b16 %v289
    %v1051 = vunpack.c.h.b16 %v289
    %v1052 = vunpack.c.l.b16 %v290
    %v1053 = vunpack.c.h.b16 %v290
    %v1054 = vunpack.c.l.b16 %v291
    %v1055 = vunpack.c.h.b16 %v291
    %v1056 = vunpack.c.l.b16 %v292
    %v1057 = vunpack.c.h.b16 %v292
    %v1058 = vunpack.c.l.b16 %v293
    %v1059 = vunpack.c.h.b16 %v293
    %v1060 = vunpack.c.l.b16 %v294
    %v1061 = vunpack.c.h.b16 %v294
    %v1062 = vunpack.c.l.b16 %v295
    %v1063 = vunpack.c.h.b16 %v295
    %v1064 = vunpack.c.l.b16 %v296
    %v1065 = vunpack.c.h.b16 %v296
    %v1066 = vunpack.c.l.b16 %v297
    %v1067 = vunpack.c.h.b16 %v297
    %v1068 = vunpack.c.l.b16 %v298
    %v1069 = vunpack.c.h.b16 %v298
    %v1070 = vunpack.c.l.b16 %v299
    %v1071 = vunpack.c.h.b16 %v299
    %v1072 = vunpack.c.l.b16 %v300
    %v1073 = vunpack.c.h.b16 %v300
    %v1074 = vunpack.c.l.b16 %v301
    %v1075 = vunpack.c.h.b16 %v301
    %v1076 = vunpack.c.l.b16 %v302
    %v1077 = vunpack.c.h.b16 %v302
    %v1078 = vunpack.c.l.b16 %v303
    %v1079 = vunpack.c.h.b16 %v303
    %v1080 = vunpack.c.l.b16 %v304
    %v1081 = vunpack.c.h.b16 %v304
    %v1082 = vunpack.c.l.b16 %v305
    %v1083 = vunpack.c.h.b16 %v305
    %v1084 = vunpack.c.l.b16 %v306
    %v1085 = vunpack.c.h.b16 %v306
    %v1086 = vunpack.c.l.b16 %v307
    %v1087 = vunpack.c.h.b16 %v307
    %v1088 = vunpack.c.l.b16 %v308
    %v1089 = vunpack.c.h.b16 %v308
    %v1090 = vunpack.c.l.b16 %v309
    %v1091 = vunpack.c.h.b16 %v309
    %v1092 = vunpack.c.l.b16 %v310
    %v1093 = vunpack.c.h.b16 %v310
    %v1094 = vunpack.c.l.b16 %v311
    %v1095 = vunpack.c.h.b16 %v311
    %v1096 = vunpack.c.l.b16 %v312
    %v1097 = vunpack.c.h.b16 %v312
    %v1098 = vunpack.c.l.b16 %v313
    %v1099 = vunpack.c.h.b16 %v313
    %v1100 = vunpack.c.l.b16 %v314
    %v1101 = vunpack.c.h.b16 %v314
    %v1102 = vunpack.c.l.b16 %v315
    %v1103 = vunpack.c.h.b16 %v315
    %v1104 = vunpack.c.l.b16 %v316
    %v1105 = vunpack.c.h.b16 %v316
    %v1106 = vunpack.c.l.b16 %v317
    %v1107 = vunpack.c.h.b16 %v317
    %v1108 = vunpack.c.l.b16 %v318
    %v1109 = vunpack.c.h.b16 %v318
    %v1110 = vunpack.c.l.b16 %v319
    %v1111 = vunpack.c.h.b16 %v319
    %v1112 = vunpack.c.l.b16 %v320
    %v1113 = vunpack.c.h.b16 %v320
    %v1114 = vunpack.c.l.b16 %v321
    %v1115 = vunpack.c.h.b16 %v321
    %v1116 = vunpack.c.l.b16 %v322
    %v1117 = vunpack.c.h.b16 %v322
    %v1118 = vunpack.c.l.b16 %v323
    %v1119 = vunpack.c.h.b16 %v323
    %v1120 = vunpack.c.l.b16 %v324
    %v1121 = vunpack.c.h.b16 %v324
    %v1122 = vunpack.c.l.b16 %v325
    %v1123 = vunpack.c.h.b16 %v325
    %v1124 = vunpack.c.l.b16 %v326
    %v1125 = vunpack.c.h.b16 %v326
    %v1126 = vunpack.c.l.b16 %v327
    %v1127 = vunpack.c.h.b16 %v327
    %v1128 = vunpack.c.l.b16 %v328
    %v1129 = vunpack.c.h.b16 %v328
    %v1130 = vunpack.c.l.b16 %v329
    %v1131 = vunpack.c.h.b16 %v329
    %v1132 = vunpack.c.l.b16 %v330
    %v1133 = vunpack.c.h.b16 %v330
    %v1134 = vunpack.c.l.b16 %v331
    %v1135 = vunpack.c.h.b16 %v331
    %v1136 = vunpack.c.l.b16 %v332
    %v1137 = vunpack.c.h.b16 %v332
    %v1138 = vunpack.c.l.b16 %v333
    %v1139 = vunpack.c.h.b16 %v333
    %v1140 = vunpack.c.l.b16 %v334
    %v1141 = vunpack.c.h.b16 %v334
    %v1142 = vunpack.c.l.b16 %v335
    %v1143 = vunpack.c.h.b16 %v335
    %v1144 = vunpack.c.l.b16 %v336
    %v1145 = vunpack.c.h.b16 %v336
    %v1146 = vunpack.c.l.b16 %v337
    %v1147 = vunpack.c.h.b16 %v337
    %v1148 = vunpack.c.l.b16 %v338
    %v1149 = vunpack.c.h.b16 %v338
    %v1150 = vunpack.c.l.b16 %v339
    %v1151 = vunpack.c.h.b16 %v339
    %v1152 = vunpack.c.l.b16 %v340
    %v1153 = vunpack.c.h.b16 %v340
    %v1154 = vunpack.c.l.b16 %v341
    %v1155 = vunpack.c.h.b16 %v341
    %v1156 = vunpack.c.l.b16 %v342
    %v1157 = vunpack.c.h.b16 %v342
    %v1158 = vunpack.c.l.b16 %v343
    %v1159 = vunpack.c.h.b16 %v343
    %v1160 = vunpack.c.l.b16 %v344
    %v1161 = vunpack.c.h.b16 %v344
    %v1162 = vunpack.c.l.b16 %v345
    %v1163 = vunpack.c.h.b16 %v345
    %v1164 = vunpack.c.l.b16 %v346
    %v1165 = vunpack.c.h.b16 %v346
    %v1166 = vunpack.c.l.b16 %v347
    %v1167 = vunpack.c.h.b16 %v347
    %v1168 = vunpack.c.l.b16 %v348
    %v1169 = vunpack.c.h.b16 %v348
    %v1170 = vunpack.c.l.b16 %v349
    %v1171 = vunpack.c.h.b16 %v349
    %v1172 = vunpack.c.l.b16 %v350
    %v1173 = vunpack.c.h.b16 %v350
    %v1174 = vunpack.c.l.b16 %v351
    %v1175 = vunpack.c.h.b16 %v351
    %v1176 = vunpack.c.l.b16 %v352
    %v1177 = vunpack.c.h.b16 %v352
    %v1178 = vunpack.c.l.b16 %v353
    %v1179 = vunpack.c.h.b16 %v353
    %v1180 = vunpack.c.l.b16 %v354
    %v1181 = vunpack.c.h.b16 %v354
    %v1182 = vunpack.c.l.b16 %v355
    %v1183 = vunpack.c.h.b16 %v355
    %v1184 = vunpack.c.l.b16 %v356
    %v1185 = vunpack.c.h.b16 %v356
    %v1186 = vunpack.c.l.b16 %v357
    %v1187 = vunpack.c.h.b16 %v357
    %v1188 = vpack.c.b16 %v684, %v676
    %v1189 = vpack.c.b16 %v685, %v677
    %v1190 = vpack.c.b16 %v686, %v678
    %v1191 = vpack.c.b16 %v687, %v679
    %v1192 = vpack.c.b16 %v688, %v680
    %v1193 = vpack.c.b16 %v689, %v681
    %v1194 = vpack.c.b16 %v690, %v682
    %v1195 = vpack.c.b16 %v691, %v683
    %v1196 = vpack.c.b16 %v700, %v692
    %v1197 = vpack.c.b16 %v701, %v693
    %v1198 = vpack.c.b16 %v702, %v694
    %v1199 = vpack.c.b16 %v703, %v695
    %v1200 = vpack.c.b16 %v704, %v696
    %v1201 = vpack.c.b16 %v705, %v697
    %v1202 = vpack.c.b16 %v706, %v698
    %v1203 = vpack.c.b16 %v707, %v699
    %v1204 = vpack.c.b16 %v716, %v708
    %v1205 = vpack.c.b16 %v717, %v709
    %v1206 = vpack.c.b16 %v718, %v710
    %v1207 = vpack.c.b16 %v719, %v711
    %v1208 = vpack.c.b16 %v720, %v712
    %v1209 = vpack.c.b16 %v721, %v713
    %v1210 = vpack.c.b16 %v722, %v714
    %v1211 = vpack.c.b16 %v723, %v715
    %v1212 = vpack.c.b16 %v732, %v724
    %v1213 = vpack.c.b16 %v733, %v725
    %v1214 = vpack.c.b16 %v734, %v726
    %v1215 = vpack.c.b16 %v735, %v727
    %v1216 = vpack.c.b16 %v736, %v728
    %v1217 = vpack.c.b16 %v737, %v729
    %v1218 = vpack.c.b16 %v738, %v730
    %v1219 = vpack.c.b16 %v739, %v731
    %v1220 = vpack.c.b16 %v748, %v740
    %v1221 = vpack.c.b16 %v749, %v741
    %v1222 = vpack.c.b16 %v750, %v742
    %v1223 = vpack.c.b16 %v751, %v743
    %v1224 = vpack.c.b16 %v752, %v744
    %v1225 = vpack.c.b16 %v753, %v745
    %v1226 = vpack.c.b16 %v754, %v746
    %v1227 = vpack.c.b16 %v755, %v747
    %v1228 = vpack.c.b16 %v764, %v756
    %v1229 = vpack.c.b16 %v765, %v757
    %v1230 = vpack.c.b16 %v766, %v758
    %v1231 = vpack.c.b16 %v767, %v759
    %v1232 = vpack.c.b16 %v768, %v760
    %v1233 = vpack.c.b16 %v769, %v761
    %v1234 = vpack.c.b16 %v770, %v762
    %v1235 = vpack.c.b16 %v771, %v763
    %v1236 = vpack.c.b16 %v780, %v772
    %v1237 = vpack.c.b16 %v781, %v773
    %v1238 = vpack.c.b16 %v782, %v774
    %v1239 = vpack.c.b16 %v783, %v775
    %v1240 = vpack.c.b16 %v784, %v776
    %v1241 = vpack.c.b16 %v785, %v777
    %v1242 = vpack.c.b16 %v786, %v778
    %v1243 = vpack.c.b16 %v787, %v779
    %v1244 = vpack.c.b16 %v796, %v788
    %v1245 = vpack.c.b16 %v797, %v789
    %v1246 = vpack.c.b16 %v798, %v790
    %v1247 = vpack.c.b16 %v799, %v791
    %v1248 = vpack.c.b16 %v800, %v792
    %v1249 = vpack.c.b16 %v801, %v793
    %v1250 = vpack.c.b16 %v802, %v794
    %v1251 = vpack.c.b16 %v803, %v795
    %v1252 = vpack.c.b16 %v812, %v804
    %v1253 = vpack.c.b16 %v813, %v805
    %v1254 = vpack.c.b16 %v814, %v806
    %v1255 = vpack.c.b16 %v815, %v807
    %v1256 = vpack.c.b16 %v816, %v808
    %v1257 = vpack.c.b16 %v817, %v809
    %v1258 = vpack.c.b16 %v818, %v810
    %v1259 = vpack.c.b16 %v819, %v811
    %v1260 = vpack.c.b16 %v828, %v820
    %v1261 = vpack.c.b16 %v829, %v821
    %v1262 = vpack.c.b16 %v830, %v822
    %v1263 = vpack.c.b16 %v831, %v823
    %v1264 = vpack.c.b16 %v832, %v824
    %v1265 = vpack.c.b16 %v833, %v825
    %v1266 = vpack.c.b16 %v834, %v826
    %v1267 = vpack.c.b16 %v835, %v827
    %v1268 = vpack.c.b16 %v844, %v836
    %v1269 = vpack.c.b16 %v845, %v837
    %v1270 = vpack.c.b16 %v846, %v838
    %v1271 = vpack.c.b16 %v847, %v839
    %v1272 = vpack.c.b16 %v848, %v840
    %v1273 = vpack.c.b16 %v849, %v841
    %v1274 = vpack.c.b16 %v850, %v842
    %v1275 = vpack.c.b16 %v851, %v843
    %v1276 = vpack.c.b16 %v860, %v852
    %v1277 = vpack.c.b16 %v861, %v853
    %v1278 = vpack.c.b16 %v862, %v854
    %v1279 = vpack.c.b16 %v863, %v855
    %v1280 = vpack.c.b16 %v864, %v856
    %v1281 = vpack.c.b16 %v865, %v857
    %v1282 = vpack.c.b16 %v866, %v858
    %v1283 = vpack.c.b16 %v867, %v859
    %v1284 = vpack.c.b16 %v876, %v868
    %v1285 = vpack.c.b16 %v877, %v869
    %v1286 = vpack.c.b16 %v878, %v870
    %v1287 = vpack.c.b16 %v879, %v871
    %v1288 = vpack.c.b16 %v880, %v872
    %v1289 = vpack.c.b16 %v881, %v873
    %v1290 = vpack.c.b16 %v882, %v874
    %v1291 = vpack.c.b16 %v883, %v875
    %v1292 = vpack.c.b16 %v892, %v884
    %v1293 = vpack.c.b16 %v893, %v885
    %v1294 = vpack.c.b16 %v894, %v886
    %v1295 = vpack.c.b16 %v895, %v887
    %v1296 = vpack.c.b16 %v896, %v888
    %v1297 = vpack.c.b16 %v897, %v889
    %v1298 = vpack.c.b16 %v898, %v890
    %v1299 = vpack.c.b16 %v899, %v891
    %v1300 = vpack.c.b16 %v908, %v900
    %v1301 = vpack.c.b16 %v909, %v901
    %v1302 = vpack.c.b16 %v910, %v902
    %v1303 = vpack.c.b16 %v911, %v903
    %v1304 = vpack.c.b16 %v912, %v904
    %v1305 = vpack.c.b16 %v913, %v905
    %v1306 = vpack.c.b16 %v914, %v906
    %v1307 = vpack.c.b16 %v915, %v907
    %v1308 = vpack.c.b16 %v924, %v916
    %v1309 = vpack.c.b16 %v925, %v917
    %v1310 = vpack.c.b16 %v926, %v918
    %v1311 = vpack.c.b16 %v927, %v919
    %v1312 = vpack.c.b16 %v928, %v920
    %v1313 = vpack.c.b16 %v929, %v921
    %v1314 = vpack.c.b16 %v930, %v922
    %v1315 = vpack.c.b16 %v931, %v923
    %v1316 = vpack.c.b16 %v940, %v932
    %v1317 = vpack.c.b16 %v941, %v933
    %v1318 = vpack.c.b16 %v942, %v934
    %v1319 = vpack.c.b16 %v943, %v935
    %v1320 = vpack.c.b16 %v944, %v936
    %v1321 = vpack.c.b16 %v945, %v937
    %v1322 = vpack.c.b16 %v946, %v938
    %v1323 = vpack.c.b16 %v947, %v939
    %v1324 = vpack.c.b16 %v956, %v948
    %v1325 = vpack.c.b16 %v957, %v949
    %v1326 = vpack.c.b16 %v958, %v950
    %v1327 = vpack.c.b16 %v959, %v951
    %v1328 = vpack.c.b16 %v960, %v952
    %v1329 = vpack.c.b16 %v961, %v953
    %v1330 = vpack.c.b16 %v962, %v954
    %v1331 = vpack.c.b16 %v963, %v955
    %v1332 = vpack.c.b16 %v972, %v964
    %v1333 = vpack.c.b16 %v973, %v965
    %v1334 = vpack.c.b16 %v974, %v966
    %v1335 = vpack.c.b16 %v975, %v967
    %v1336 = vpack.c.b16 %v976, %v968
    %v1337 = vpack.c.b16 %v977, %v969
    %v1338 = vpack.c.b16 %v978, %v970
    %v1339 = vpack.c.b16 %v979, %v971
    %v1340 = vpack.c.b16 %v988, %v980
    %v1341 = vpack.c.b16 %v989, %v981
    %v1342 = vpack.c.b16 %v990, %v982
    %v1343 = vpack.c.b16 %v991, %v983
    %v1344 = vpack.c.b16 %v992, %v984
    %v1345 = vpack.c.b16 %v993, %v985
    %v1346 = vpack.c.b16 %v994, %v986
    %v1347 = vpack.c.b16 %v995, %v987
    %v1348 = vpack.c.b16 %v1004, %v996
    %v1349 = vpack.c.b16 %v1005, %v997
    %v1350 = vpack.c.b16 %v1006, %v998
    %v1351 = vpack.c.b16 %v1007, %v999
    %v1352 = vpack.c.b16 %v1008, %v1000
    %v1353 = vpack.c.b16 %v1009, %v1001
    %v1354 = vpack.c.b16 %v1010, %v1002
    %v1355 = vpack.c.b16 %v1011, %v1003
    %v1356 = vpack.c.b16 %v1020, %v1012
    %v1357 = vpack.c.b16 %v1021, %v1013
    %v1358 = vpack.c.b16 %v1022, %v1014
    %v1359 = vpack.c.b16 %v1023, %v1015
    %v1360 = vpack.c.b16 %v1024, %v1016
    %v1361 = vpack.c.b16 %v1025, %v1017
    %v1362 = vpack.c.b16 %v1026, %v1018
    %v1363 = vpack.c.b16 %v1027, %v1019
    %v1364 = vpack.c.b16 %v1036, %v1028
    %v1365 = vpack.c.b16 %v1037, %v1029
    %v1366 = vpack.c.b16 %v1038, %v1030
    %v1367 = vpack.c.b16 %v1039, %v1031
    %v1368 = vpack.c.b16 %v1040, %v1032
    %v1369 = vpack.c.b16 %v1041, %v1033
    %v1370 = vpack.c.b16 %v1042, %v1034
    %v1371 = vpack.c.b16 %v1043, %v1035
    %v1372 = vpack.c.b16 %v1052, %v1044
    %v1373 = vpack.c.b16 %v1053, %v1045
    %v1374 = vpack.c.b16 %v1054, %v1046
    %v1375 = vpack.c.b16 %v1055, %v1047
    %v1376 = vpack.c.b16 %v1056, %v1048
    %v1377 = vpack.c.b16 %v1057, %v1049
    %v1378 = vpack.c.b16 %v1058, %v1050
    %v1379 = vpack.c.b16 %v1059, %v1051
    %v1380 = vpack.c.b16 %v1068, %v1060
    %v1381 = vpack.c.b16 %v1069, %v1061
    %v1382 = vpack.c.b16 %v1070, %v1062
    %v1383 = vpack.c.b16 %v1071, %v1063
    %v1384 = vpack.c.b16 %v1072, %v1064
    %v1385 = vpack.c.b16 %v1073, %v1065
    %v1386 = vpack.c.b16 %v1074, %v1066
    %v1387 = vpack.c.b16 %v1075, %v1067
    %v1388 = vpack.c.b16 %v1084, %v1076
    %v1389 = vpack.c.b16 %v1085, %v1077
    %v1390 = vpack.c.b16 %v1086, %v1078
    %v1391 = vpack.c.b16 %v1087, %v1079
    %v1392 = vpack.c.b16 %v1088, %v1080
    %v1393 = vpack.c.b16 %v1089, %v1081
    %v1394 = vpack.c.b16 %v1090, %v1082
    %v1395 = vpack.c.b16 %v1091, %v1083
    %v1396 = vpack.c.b16 %v1100, %v1092
    %v1397 = vpack.c.b16 %v1101, %v1093
    %v1398 = vpack.c.b16 %v1102, %v1094
    %v1399 = vpack.c.b16 %v1103, %v1095
    %v1400 = vpack.c.b16 %v1104, %v1096
    %v1401 = vpack.c.b16 %v1105, %v1097
    %v1402 = vpack.c.b16 %v1106, %v1098
    %v1403 = vpack.c.b16 %v1107, %v1099
    %v1404 = vpack.c.b16 %v1116, %v1108
    %v1405 = vpack.c.b16 %v1117, %v1109
    %v1406 = vpack.c.b16 %v1118, %v1110
    %v1407 = vpack.c.b16 %v1119, %v1111
    %v1408 = vpack.c.b16 %v1120, %v1112
    %v1409 = vpack.c.b16 %v1121, %v1113
    %v1410 = vpack.c.b16 %v1122, %v1114
    %v1411 = vpack.c.b16 %v1123, %v1115
    %v1412 = vpack.c.b16 %v1132, %v1124
    %v1413 = vpack.c.b16 %v1133, %v1125
    %v1414 = vpack.c.b16 %v1134, %v1126
    %v1415 = vpack.c.b16 %v1135, %v1127
    %v1416 = vpack.c.b16 %v1136, %v1128
    %v1417 = vpack.c.b16 %v1137, %v1129
    %v1418 = vpack.c.b16 %v1138, %v1130
    %v1419 = vpack.c.b16 %v1139, %v1131
    %v1420 = vpack.c.b16 %v1148, %v1140
    %v1421 = vpack.c.b16 %v1149, %v1141
    %v1422 = vpack.c.b16 %v1150, %v1142
    %v1423 = vpack.c.b16 %v1151, %v1143
    %v1424 = vpack.c.b16 %v1152, %v1144
    %v1425 = vpack.c.b16 %v1153, %v1145
    %v1426 = vpack.c.b16 %v1154, %v1146
    %v1427 = vpack.c.b16 %v1155, %v1147
    %v1428 = vpack.c.b16 %v1164, %v1156
    %v1429 = vpack.c.b16 %v1165, %v1157
    %v1430 = vpack.c.b16 %v1166, %v1158
    %v1431 = vpack.c.b16 %v1167, %v1159
    %v1432 = vpack.c.b16 %v1168, %v1160
    %v1433 = vpack.c.b16 %v1169, %v1161
    %v1434 = vpack.c.b16 %v1170, %v1162
    %v1435 = vpack.c.b16 %v1171, %v1163
    %v1436 = vpack.c.b16 %v1180, %v1172
    %v1437 = vpack.c.b16 %v1181, %v1173
    %v1438 = vpack.c.b16 %v1182, %v1174
    %v1439 = vpack.c.b16 %v1183, %v1175
    %v1440 = vpack.c.b16 %v1184, %v1176
    %v1441 = vpack.c.b16 %v1185, %v1177
    %v1442 = vpack.c.b16 %v1186, %v1178
    %v1443 = vpack.c.b16 %v1187, %v1179
    %1700 = vmatprep.subr.bf16.mxu0 %v1245
    %1701 = vmatpush1.bf16.msra.mxu0 %v1244
    %1702 = vmatprep.subr.bf16.mxu0 %v1237
    %1703 = vmatpush1.bf16.msra.mxu0 %v1236
    %1704 = vmatprep.subr.bf16.mxu0 %v1229
    %1705 = vmatpush1.bf16.msra.mxu0 %v1228
    %1706 = vmatprep.subr.bf16.mxu0 %v1221
    %1707 = vmatpush1.bf16.msra.mxu0 %v1220
    %1708 = vmatprep.subr.bf16.mxu0 %v1213
    %1709 = vmatpush1.bf16.msra.mxu0 %v1212
    %1710 = vmatprep.subr.bf16.mxu0 %v1205
    %1711 = vmatpush1.bf16.msra.mxu0 %v1204
    %1712 = vmatprep.subr.bf16.mxu0 %v1197
    %1713 = vmatpush1.bf16.msra.mxu0 %v1196
    %1714 = vmatprep.subr.bf16.mxu0 %v1189
    %1715 = vmatpush1.bf16.msra.mxu0 %v1188
    %1716 = vmatprep.subr.bf16.mxu0 %v1309
    %1717 = vmatpush2.bf16.msra.mxu0 %v1308
    %1718 = vmatprep.subr.bf16.mxu0 %v1301
    %1719 = vmatpush2.bf16.msra.mxu0 %v1300
    %1720 = vmatprep.subr.bf16.mxu0 %v1293
    %1721 = vmatpush2.bf16.msra.mxu0 %v1292
    %1722 = vmatprep.subr.bf16.mxu0 %v1285
    %1723 = vmatpush2.bf16.msra.mxu0 %v1284
    %1724 = vmatprep.subr.bf16.mxu0 %v1277
    %1725 = vmatpush2.bf16.msra.mxu0 %v1276
    %1726 = vmatprep.subr.bf16.mxu0 %v1269
    %1727 = vmatpush2.bf16.msra.mxu0 %v1268
    %1728 = vmatprep.subr.bf16.mxu0 %v1261
    %1729 = vmatpush2.bf16.msra.mxu0 %v1260
    %1730 = vmatprep.subr.bf16.mxu0 %v1253
    %1731 = vmatpush2.bf16.msra.mxu0 %v1252
    %1732 = vmatprep.mubr.bf16.mxu0 %v413
    %1733 = vmatmul.mubr.bf16.gmra.mxu0 %v412
    %v1734 = vpop.f32.mrf.mxu0
    %v1735 = vadd.f32 %v363, %v1734
    %v1736 = vpop.f32.mrf.mxu0
    %v1737 = vadd.f32 %v367, %v1736
    %v1738 = vpop.f32.mrf.mxu0
    %v1739 = vadd.f32 %v363, %v1738
    %v1740 = vpop.f32.mrf.mxu0
    %v1741 = vadd.f32 %v367, %v1740
    %1742 = vdwg.mxu0
    %1743 = vmatprep.subr.bf16.mxu0 %v1373
    %1744 = vmatpush1.bf16.msra.mxu0 %v1372
    %1745 = vmatprep.subr.bf16.mxu0 %v1365
    %1746 = vmatpush1.bf16.msra.mxu0 %v1364
    %1747 = vmatprep.subr.bf16.mxu0 %v1357
    %1748 = vmatpush1.bf16.msra.mxu0 %v1356
    %1749 = vmatprep.subr.bf16.mxu0 %v1349
    %1750 = vmatpush1.bf16.msra.mxu0 %v1348
    %1751 = vmatprep.subr.bf16.mxu0 %v1341
    %1752 = vmatpush1.bf16.msra.mxu0 %v1340
    %1753 = vmatprep.subr.bf16.mxu0 %v1333
    %1754 = vmatpush1.bf16.msra.mxu0 %v1332
    %1755 = vmatprep.subr.bf16.mxu0 %v1325
    %1756 = vmatpush1.bf16.msra.mxu0 %v1324
    %1757 = vmatprep.subr.bf16.mxu0 %v1317
    %1758 = vmatpush1.bf16.msra.mxu0 %v1316
    %1759 = vmatprep.subr.bf16.mxu0 %v1437
    %1760 = vmatpush2.bf16.msra.mxu0 %v1436
    %1761 = vmatprep.subr.bf16.mxu0 %v1429
    %1762 = vmatpush2.bf16.msra.mxu0 %v1428
    %1763 = vmatprep.subr.bf16.mxu0 %v1421
    %1764 = vmatpush2.bf16.msra.mxu0 %v1420
    %1765 = vmatprep.subr.bf16.mxu0 %v1413
    %1766 = vmatpush2.bf16.msra.mxu0 %v1412
    %1767 = vmatprep.subr.bf16.mxu0 %v1405
    %1768 = vmatpush2.bf16.msra.mxu0 %v1404
    %1769 = vmatprep.subr.bf16.mxu0 %v1397
    %1770 = vmatpush2.bf16.msra.mxu0 %v1396
    %1771 = vmatprep.subr.bf16.mxu0 %v1389
    %1772 = vmatpush2.bf16.msra.mxu0 %v1388
    %1773 = vmatprep.subr.bf16.mxu0 %v1381
    %1774 = vmatpush2.bf16.msra.mxu0 %v1380
    %1775 = vmatprep.mubr.bf16.mxu0 %v415
    %1776 = vmatmul.mubr.bf16.gmra.mxu0 %v414
    %v1777 = vpop.f32.mrf.mxu0
    %v1778 = vadd.f32 %v1735, %v1777
    %v1779 = vpop.f32.mrf.mxu0
    %v1780 = vadd.f32 %v1737, %v1779
    %v1781 = vpop.f32.mrf.mxu0
    %v1782 = vadd.f32 %v1739, %v1781
    %v1783 = vpop.f32.mrf.mxu0
    %v1784 = vadd.f32 %v1741, %v1783
    %1785 = vdwg.mxu0
    %1786 = vmatprep.subr.bf16.mxu0 %v1247
    %1787 = vmatpush1.bf16.msra.mxu0 %v1246
    %1788 = vmatprep.subr.bf16.mxu0 %v1239
    %1789 = vmatpush1.bf16.msra.mxu0 %v1238
    %1790 = vmatprep.subr.bf16.mxu0 %v1231
    %1791 = vmatpush1.bf16.msra.mxu0 %v1230
    %1792 = vmatprep.subr.bf16.mxu0 %v1223
    %1793 = vmatpush1.bf16.msra.mxu0 %v1222
    %1794 = vmatprep.subr.bf16.mxu0 %v1215
    %1795 = vmatpush1.bf16.msra.mxu0 %v1214
    %1796 = vmatprep.subr.bf16.mxu0 %v1207
    %1797 = vmatpush1.bf16.msra.mxu0 %v1206
    %1798 = vmatprep.subr.bf16.mxu0 %v1199
    %1799 = vmatpush1.bf16.msra.mxu0 %v1198
    %1800 = vmatprep.subr.bf16.mxu0 %v1191
    %1801 = vmatpush1.bf16.msra.mxu0 %v1190
    %1802 = vmatprep.subr.bf16.mxu0 %v1311
    %1803 = vmatpush2.bf16.msra.mxu0 %v1310
    %1804 = vmatprep.subr.bf16.mxu0 %v1303
    %1805 = vmatpush2.bf16.msra.mxu0 %v1302
    %1806 = vmatprep.subr.bf16.mxu0 %v1295
    %1807 = vmatpush2.bf16.msra.mxu0 %v1294
    %1808 = vmatprep.subr.bf16.mxu0 %v1287
    %1809 = vmatpush2.bf16.msra.mxu0 %v1286
    %1810 = vmatprep.subr.bf16.mxu0 %v1279
    %1811 = vmatpush2.bf16.msra.mxu0 %v1278
    %1812 = vmatprep.subr.bf16.mxu0 %v1271
    %1813 = vmatpush2.bf16.msra.mxu0 %v1270
    %1814 = vmatprep.subr.bf16.mxu0 %v1263
    %1815 = vmatpush2.bf16.msra.mxu0 %v1262
    %1816 = vmatprep.subr.bf16.mxu0 %v1255
    %1817 = vmatpush2.bf16.msra.mxu0 %v1254
    %1818 = vmatprep.mubr.bf16.mxu0 %v413
    %1819 = vmatmul.mubr.bf16.gmra.mxu0 %v412
    %v1820 = vpop.f32.mrf.mxu0
    %v1821 = vadd.f32 %v371, %v1820
    %v1822 = vpop.f32.mrf.mxu0
    %v1823 = vadd.f32 %v375, %v1822
    %v1824 = vpop.f32.mrf.mxu0
    %v1825 = vadd.f32 %v371, %v1824
    %v1826 = vpop.f32.mrf.mxu0
    %v1827 = vadd.f32 %v375, %v1826
    %1828 = vdwg.mxu0
    %1829 = vmatprep.subr.bf16.mxu0 %v1375
    %1830 = vmatpush1.bf16.msra.mxu0 %v1374
    %1831 = vmatprep.subr.bf16.mxu0 %v1367
    %1832 = vmatpush1.bf16.msra.mxu0 %v1366
    %1833 = vmatprep.subr.bf16.mxu0 %v1359
    %1834 = vmatpush1.bf16.msra.mxu0 %v1358
    %1835 = vmatprep.subr.bf16.mxu0 %v1351
    %1836 = vmatpush1.bf16.msra.mxu0 %v1350
    %1837 = vmatprep.subr.bf16.mxu0 %v1343
    %1838 = vmatpush1.bf16.msra.mxu0 %v1342
    %1839 = vmatprep.subr.bf16.mxu0 %v1335
    %1840 = vmatpush1.bf16.msra.mxu0 %v1334
    %1841 = vmatprep.subr.bf16.mxu0 %v1327
    %1842 = vmatpush1.bf16.msra.mxu0 %v1326
    %1843 = vmatprep.subr.bf16.mxu0 %v1319
    %1844 = vmatpush1.bf16.msra.mxu0 %v1318
    %1845 = vmatprep.subr.bf16.mxu0 %v1439
    %1846 = vmatpush2.bf16.msra.mxu0 %v1438
    %1847 = vmatprep.subr.bf16.mxu0 %v1431
    %1848 = vmatpush2.bf16.msra.mxu0 %v1430
    %1849 = vmatprep.subr.bf16.mxu0 %v1423
    %1850 = vmatpush2.bf16.msra.mxu0 %v1422
    %1851 = vmatprep.subr.bf16.mxu0 %v1415
    %1852 = vmatpush2.bf16.msra.mxu0 %v1414
    %1853 = vmatprep.subr.bf16.mxu0 %v1407
    %1854 = vmatpush2.bf16.msra.mxu0 %v1406
    %1855 = vmatprep.subr.bf16.mxu0 %v1399
    %1856 = vmatpush2.bf16.msra.mxu0 %v1398
    %1857 = vmatprep.subr.bf16.mxu0 %v1391
    %1858 = vmatpush2.bf16.msra.mxu0 %v1390
    %1859 = vmatprep.subr.bf16.mxu0 %v1383
    %1860 = vmatpush2.bf16.msra.mxu0 %v1382
    %1861 = vmatprep.mubr.bf16.mxu0 %v415
    %1862 = vmatmul.mubr.bf16.gmra.mxu0 %v414
    %v1863 = vpop.f32.mrf.mxu0
    %v1864 = vadd.f32 %v1821, %v1863
    %v1865 = vpop.f32.mrf.mxu0
    %v1866 = vadd.f32 %v1823, %v1865
    %v1867 = vpop.f32.mrf.mxu0
    %v1868 = vadd.f32 %v1825, %v1867
    %v1869 = vpop.f32.mrf.mxu0
    %v1870 = vadd.f32 %v1827, %v1869
    %1871 = vdwg.mxu0
    %1872 = vmatprep.subr.bf16.mxu0 %v1249
    %1873 = vmatpush1.bf16.msra.mxu0 %v1248
    %1874 = vmatprep.subr.bf16.mxu0 %v1241
    %1875 = vmatpush1.bf16.msra.mxu0 %v1240
    %1876 = vmatprep.subr.bf16.mxu0 %v1233
    %1877 = vmatpush1.bf16.msra.mxu0 %v1232
    %1878 = vmatprep.subr.bf16.mxu0 %v1225
    %1879 = vmatpush1.bf16.msra.mxu0 %v1224
    %1880 = vmatprep.subr.bf16.mxu0 %v1217
    %1881 = vmatpush1.bf16.msra.mxu0 %v1216
    %1882 = vmatprep.subr.bf16.mxu0 %v1209
    %1883 = vmatpush1.bf16.msra.mxu0 %v1208
    %1884 = vmatprep.subr.bf16.mxu0 %v1201
    %1885 = vmatpush1.bf16.msra.mxu0 %v1200
    %1886 = vmatprep.subr.bf16.mxu0 %v1193
    %1887 = vmatpush1.bf16.msra.mxu0 %v1192
    %1888 = vmatprep.subr.bf16.mxu0 %v1313
    %1889 = vmatpush2.bf16.msra.mxu0 %v1312
    %1890 = vmatprep.subr.bf16.mxu0 %v1305
    %1891 = vmatpush2.bf16.msra.mxu0 %v1304
    %1892 = vmatprep.subr.bf16.mxu0 %v1297
    %1893 = vmatpush2.bf16.msra.mxu0 %v1296
    %1894 = vmatprep.subr.bf16.mxu0 %v1289
    %1895 = vmatpush2.bf16.msra.mxu0 %v1288
    %1896 = vmatprep.subr.bf16.mxu0 %v1281
    %1897 = vmatpush2.bf16.msra.mxu0 %v1280
    %1898 = vmatprep.subr.bf16.mxu0 %v1273
    %1899 = vmatpush2.bf16.msra.mxu0 %v1272
    %1900 = vmatprep.subr.bf16.mxu0 %v1265
    %1901 = vmatpush2.bf16.msra.mxu0 %v1264
    %1902 = vmatprep.subr.bf16.mxu0 %v1257
    %1903 = vmatpush2.bf16.msra.mxu0 %v1256
    %1904 = vmatprep.mubr.bf16.mxu0 %v413
    %1905 = vmatmul.mubr.bf16.gmra.mxu0 %v412
    %v1906 = vpop.f32.mrf.mxu0
    %v1907 = vadd.f32 %v379, %v1906
    %v1908 = vpop.f32.mrf.mxu0
    %v1909 = vadd.f32 %v383, %v1908
    %v1910 = vpop.f32.mrf.mxu0
    %v1911 = vadd.f32 %v379, %v1910
    %v1912 = vpop.f32.mrf.mxu0
    %v1913 = vadd.f32 %v383, %v1912
    %1914 = vdwg.mxu0
    %1915 = vmatprep.subr.bf16.mxu0 %v1377
    %1916 = vmatpush1.bf16.msra.mxu0 %v1376
    %1917 = vmatprep.subr.bf16.mxu0 %v1369
    %1918 = vmatpush1.bf16.msra.mxu0 %v1368
    %1919 = vmatprep.subr.bf16.mxu0 %v1361
    %1920 = vmatpush1.bf16.msra.mxu0 %v1360
    %1921 = vmatprep.subr.bf16.mxu0 %v1353
    %1922 = vmatpush1.bf16.msra.mxu0 %v1352
    %1923 = vmatprep.subr.bf16.mxu0 %v1345
    %1924 = vmatpush1.bf16.msra.mxu0 %v1344
    %1925 = vmatprep.subr.bf16.mxu0 %v1337
    %1926 = vmatpush1.bf16.msra.mxu0 %v1336
    %1927 = vmatprep.subr.bf16.mxu0 %v1329
    %1928 = vmatpush1.bf16.msra.mxu0 %v1328
    %1929 = vmatprep.subr.bf16.mxu0 %v1321
    %1930 = vmatpush1.bf16.msra.mxu0 %v1320
    %1931 = vmatprep.subr.bf16.mxu0 %v1441
    %1932 = vmatpush2.bf16.msra.mxu0 %v1440
    %1933 = vmatprep.subr.bf16.mxu0 %v1433
    %1934 = vmatpush2.bf16.msra.mxu0 %v1432
    %1935 = vmatprep.subr.bf16.mxu0 %v1425
    %1936 = vmatpush2.bf16.msra.mxu0 %v1424
    %1937 = vmatprep.subr.bf16.mxu0 %v1417
    %1938 = vmatpush2.bf16.msra.mxu0 %v1416
    %1939 = vmatprep.subr.bf16.mxu0 %v1409
    %1940 = vmatpush2.bf16.msra.mxu0 %v1408
    %1941 = vmatprep.subr.bf16.mxu0 %v1401
    %1942 = vmatpush2.bf16.msra.mxu0 %v1400
    %1943 = vmatprep.subr.bf16.mxu0 %v1393
    %1944 = vmatpush2.bf16.msra.mxu0 %v1392
    %1945 = vmatprep.subr.bf16.mxu0 %v1385
    %1946 = vmatpush2.bf16.msra.mxu0 %v1384
    %1947 = vmatprep.mubr.bf16.mxu0 %v415
    %1948 = vmatmul.mubr.bf16.gmra.mxu0 %v414
    %v1949 = vpop.f32.mrf.mxu0
    %v1950 = vadd.f32 %v1907, %v1949
    %v1951 = vpop.f32.mrf.mxu0
    %v1952 = vadd.f32 %v1909, %v1951
    %v1953 = vpop.f32.mrf.mxu0
    %v1954 = vadd.f32 %v1911, %v1953
    %v1955 = vpop.f32.mrf.mxu0
    %v1956 = vadd.f32 %v1913, %v1955
    %1957 = vdwg.mxu0
    %1958 = vmatprep.subr.bf16.mxu0 %v1251
    %1959 = vmatpush1.bf16.msra.mxu0 %v1250
    %1960 = vmatprep.subr.bf16.mxu0 %v1243
    %1961 = vmatpush1.bf16.msra.mxu0 %v1242
    %1962 = vmatprep.subr.bf16.mxu0 %v1235
    %1963 = vmatpush1.bf16.msra.mxu0 %v1234
    %1964 = vmatprep.subr.bf16.mxu0 %v1227
    %1965 = vmatpush1.bf16.msra.mxu0 %v1226
    %1966 = vmatprep.subr.bf16.mxu0 %v1219
    %1967 = vmatpush1.bf16.msra.mxu0 %v1218
    %1968 = vmatprep.subr.bf16.mxu0 %v1211
    %1969 = vmatpush1.bf16.msra.mxu0 %v1210
    %1970 = vmatprep.subr.bf16.mxu0 %v1203
    %1971 = vmatpush1.bf16.msra.mxu0 %v1202
    %1972 = vmatprep.subr.bf16.mxu0 %v1195
    %1973 = vmatpush1.bf16.msra.mxu0 %v1194
    %1974 = vmatprep.subr.bf16.mxu0 %v1315
    %1975 = vmatpush2.bf16.msra.mxu0 %v1314
    %1976 = vmatprep.subr.bf16.mxu0 %v1307
    %1977 = vmatpush2.bf16.msra.mxu0 %v1306
    %1978 = vmatprep.subr.bf16.mxu0 %v1299
    %1979 = vmatpush2.bf16.msra.mxu0 %v1298
    %1980 = vmatprep.subr.bf16.mxu0 %v1291
    %1981 = vmatpush2.bf16.msra.mxu0 %v1290
    %1982 = vmatprep.subr.bf16.mxu0 %v1283
    %1983 = vmatpush2.bf16.msra.mxu0 %v1282
    %1984 = vmatprep.subr.bf16.mxu0 %v1275
    %1985 = vmatpush2.bf16.msra.mxu0 %v1274
    %1986 = vmatprep.subr.bf16.mxu0 %v1267
    %1987 = vmatpush2.bf16.msra.mxu0 %v1266
    %1988 = vmatprep.subr.bf16.mxu0 %v1259
    %1989 = vmatpush2.bf16.msra.mxu0 %v1258
    %1990 = vmatprep.mubr.bf16.mxu0 %v413
    %1991 = vmatmul.mubr.bf16.gmra.mxu0 %v412
    %v1992 = vpop.f32.mrf.mxu0
    %v1993 = vadd.f32 %v387, %v1992
    %v1994 = vpop.f32.mrf.mxu0
    %v1995 = vadd.f32 %v391, %v1994
    %v1996 = vpop.f32.mrf.mxu0
    %v1997 = vadd.f32 %v387, %v1996
    %v1998 = vpop.f32.mrf.mxu0
    %v1999 = vadd.f32 %v391, %v1998
    %2000 = vdwg.mxu0
    %2001 = vmatprep.subr.bf16.mxu0 %v1379
    %2002 = vmatpush1.bf16.msra.mxu0 %v1378
    %2003 = vmatprep.subr.bf16.mxu0 %v1371
    %2004 = vmatpush1.bf16.msra.mxu0 %v1370
    %2005 = vmatprep.subr.bf16.mxu0 %v1363
    %2006 = vmatpush1.bf16.msra.mxu0 %v1362
    %2007 = vmatprep.subr.bf16.mxu0 %v1355
    %2008 = vmatpush1.bf16.msra.mxu0 %v1354
    %2009 = vmatprep.subr.bf16.mxu0 %v1347
    %2010 = vmatpush1.bf16.msra.mxu0 %v1346
    %2011 = vmatprep.subr.bf16.mxu0 %v1339
    %2012 = vmatpush1.bf16.msra.mxu0 %v1338
    %2013 = vmatprep.subr.bf16.mxu0 %v1331
    %2014 = vmatpush1.bf16.msra.mxu0 %v1330
    %2015 = vmatprep.subr.bf16.mxu0 %v1323
    %2016 = vmatpush1.bf16.msra.mxu0 %v1322
    %2017 = vmatprep.subr.bf16.mxu0 %v1443
    %2018 = vmatpush2.bf16.msra.mxu0 %v1442
    %2019 = vmatprep.subr.bf16.mxu0 %v1435
    %2020 = vmatpush2.bf16.msra.mxu0 %v1434
    %2021 = vmatprep.subr.bf16.mxu0 %v1427
    %2022 = vmatpush2.bf16.msra.mxu0 %v1426
    %2023 = vmatprep.subr.bf16.mxu0 %v1419
    %2024 = vmatpush2.bf16.msra.mxu0 %v1418
    %2025 = vmatprep.subr.bf16.mxu0 %v1411
    %2026 = vmatpush2.bf16.msra.mxu0 %v1410
    %2027 = vmatprep.subr.bf16.mxu0 %v1403
    %2028 = vmatpush2.bf16.msra.mxu0 %v1402
    %2029 = vmatprep.subr.bf16.mxu0 %v1395
    %2030 = vmatpush2.bf16.msra.mxu0 %v1394
    %2031 = vmatprep.subr.bf16.mxu0 %v1387
    %2032 = vmatpush2.bf16.msra.mxu0 %v1386
    %2033 = vmatprep.mubr.bf16.mxu0 %v415
    %2034 = vmatmul.mubr.bf16.gmra.mxu0 %v414
    %v2035 = vpop.f32.mrf.mxu0
    %v2036 = vadd.f32 %v1993, %v2035
    %v2037 = vpop.f32.mrf.mxu0
    %v2038 = vadd.f32 %v1995, %v2037
    %v2039 = vpop.f32.mrf.mxu0
    %v2040 = vadd.f32 %v1997, %v2039
    %v2041 = vpop.f32.mrf.mxu0
    %v2042 = vadd.f32 %v1999, %v2041
    %2043 = vdwg.mxu0
    %v2044 = vmax.f32 %v1778, 0.0
    %v2045 = vmax.f32 %v1780, 0.0
    %v2046 = vmax.f32 %v1864, 0.0
    %v2047 = vmax.f32 %v1866, 0.0
    %v2048 = vmax.f32 %v1950, 0.0
    %v2049 = vmax.f32 %v1952, 0.0
    %v2050 = vmax.f32 %v2036, 0.0
    %v2051 = vmax.f32 %v2038, 0.0
    %v2052 = vmax.f32 %v1782, 0.0
    %v2053 = vmax.f32 %v1784, 0.0
    %v2054 = vmax.f32 %v1868, 0.0
    %v2055 = vmax.f32 %v1870, 0.0
    %v2056 = vmax.f32 %v1954, 0.0
    %v2057 = vmax.f32 %v1956, 0.0
    %v2058 = vmax.f32 %v2040, 0.0
    %v2059 = vmax.f32 %v2042, 0.0
    %v2060 = vpack.c.bf16 %v2052, %v2044
    %v2061 = vpack.c.bf16 %v2053, %v2045
    %v2062 = vpack.c.bf16 %v2054, %v2046
    %v2063 = vpack.c.bf16 %v2055, %v2047
    %v2064 = vpack.c.bf16 %v2056, %v2048
    %v2065 = vpack.c.bf16 %v2057, %v2049
    %v2066 = vpack.c.bf16 %v2058, %v2050
    %v2067 = vpack.c.bf16 %v2059, %v2051
    %v2068 = vld [vmem:[#allocation8] sm:$0xf]
    %v2069 = vld [vmem:[#allocation8 + $0x4] sm:$0xf]
    %v2070 = vld [vmem:[#allocation8 + $0x8] sm:$0xf]
    %v2071 = vld [vmem:[#allocation8 + $0xc] sm:$0xf]
    %v2072 = vld [vmem:[#allocation8 + $0x10] sm:$0xf]
    %v2073 = vld [vmem:[#allocation8 + $0x14] sm:$0xf]
    %v2074 = vld [vmem:[#allocation8 + $0x18] sm:$0xf]
    %v2075 = vld [vmem:[#allocation8 + $0x1c] sm:$0xf]
    %v2076 = vld [vmem:[#allocation8 + $0x20] sm:$0xf]
    %v2077 = vld [vmem:[#allocation8 + $0x24] sm:$0xf]
    %v2078 = vld [vmem:[#allocation8 + $0x28] sm:$0xf]
    %v2079 = vld [vmem:[#allocation8 + $0x2c] sm:$0xf]
    %v2080 = vld [vmem:[#allocation8 + $0x30] sm:$0xf]
    %v2081 = vld [vmem:[#allocation8 + $0x34] sm:$0xf]
    %v2082 = vld [vmem:[#allocation8 + $0x38] sm:$0xf]
    %v2083 = vld [vmem:[#allocation8 + $0x3c] sm:$0xf]
    %v2084 = vld [vmem:[#allocation8 + $0x40] sm:$0xf]
    %v2085 = vld [vmem:[#allocation8 + $0x44] sm:$0xf]
    %v2086 = vld [vmem:[#allocation8 + $0x48] sm:$0xf]
    %v2087 = vld [vmem:[#allocation8 + $0x4c] sm:$0xf]
    %v2088 = vld [vmem:[#allocation8 + $0x50] sm:$0xf]
    %v2089 = vld [vmem:[#allocation8 + $0x54] sm:$0xf]
    %v2090 = vld [vmem:[#allocation8 + $0x58] sm:$0xf]
    %v2091 = vld [vmem:[#allocation8 + $0x5c] sm:$0xf]
    %v2092 = vld [vmem:[#allocation8 + $0x60] sm:$0xf]
    %v2093 = vld [vmem:[#allocation8 + $0x64] sm:$0xf]
    %v2094 = vld [vmem:[#allocation8 + $0x68] sm:$0xf]
    %v2095 = vld [vmem:[#allocation8 + $0x6c] sm:$0xf]
    %v2096 = vld [vmem:[#allocation8 + $0x70] sm:$0xf]
    %v2097 = vld [vmem:[#allocation8 + $0x74] sm:$0xf]
    %v2098 = vld [vmem:[#allocation8 + $0x78] sm:$0xf]
    %v2099 = vld [vmem:[#allocation8 + $0x7c] sm:$0xf]
    %v2100 = vld [vmem:[#allocation8 + $0x80] sm:$0xf]
    %v2101 = vld [vmem:[#allocation8 + $0x84] sm:$0xf]
    %v2102 = vld [vmem:[#allocation8 + $0x88] sm:$0xf]
    %v2103 = vld [vmem:[#allocation8 + $0x8c] sm:$0xf]
    %v2104 = vld [vmem:[#allocation8 + $0x90] sm:$0xf]
    %v2105 = vld [vmem:[#allocation8 + $0x94] sm:$0xf]
    %v2106 = vld [vmem:[#allocation8 + $0x98] sm:$0xf]
    %v2107 = vld [vmem:[#allocation8 + $0x9c] sm:$0xf]
    %v2108 = vld [vmem:[#allocation8 + $0xa0] sm:$0xf]
    %v2109 = vld [vmem:[#allocation8 + $0xa4] sm:$0xf]
    %v2110 = vld [vmem:[#allocation8 + $0xa8] sm:$0xf]
    %v2111 = vld [vmem:[#allocation8 + $0xac] sm:$0xf]
    %v2112 = vld [vmem:[#allocation8 + $0xb0] sm:$0xf]
    %v2113 = vld [vmem:[#allocation8 + $0xb4] sm:$0xf]
    %v2114 = vld [vmem:[#allocation8 + $0xb8] sm:$0xf]
    %v2115 = vld [vmem:[#allocation8 + $0xbc] sm:$0xf]
    %v2116 = vld [vmem:[#allocation8 + $0xc0] sm:$0xf]
    %v2117 = vld [vmem:[#allocation8 + $0xc4] sm:$0xf]
    %v2118 = vld [vmem:[#allocation8 + $0xc8] sm:$0xf]
    %v2119 = vld [vmem:[#allocation8 + $0xcc] sm:$0xf]
    %v2120 = vld [vmem:[#allocation8 + $0xd0] sm:$0xf]
    %v2121 = vld [vmem:[#allocation8 + $0xd4] sm:$0xf]
    %v2122 = vld [vmem:[#allocation8 + $0xd8] sm:$0xf]
    %v2123 = vld [vmem:[#allocation8 + $0xdc] sm:$0xf]
    %v2124 = vld [vmem:[#allocation8 + $0xe0] sm:$0xf]
    %v2125 = vld [vmem:[#allocation8 + $0xe4] sm:$0xf]
    %v2126 = vld [vmem:[#allocation8 + $0xe8] sm:$0xf]
    %v2127 = vld [vmem:[#allocation8 + $0xec] sm:$0xf]
    %v2128 = vld [vmem:[#allocation8 + $0xf0] sm:$0xf]
    %v2129 = vld [vmem:[#allocation8 + $0xf4] sm:$0xf]
    %v2130 = vld [vmem:[#allocation8 + $0xf8] sm:$0xf]
    %v2131 = vld [vmem:[#allocation8 + $0xfc] sm:$0xf]
    %v2132 = vld [vmem:[%s4] sm:$0x1]
    %v2134 = vlaneseq
    %v2135 = vshrl.u32 %v2134, 7
    %v2136 = vsub.s32 0, %v2135
    %v2137 = vrot.slane %v2132, %v2136
    %v2203 = vunpack.c.l.b16 %v2068
    %v2204 = vunpack.c.l.b16 %v2069
    %v2205 = vunpack.c.l.b16 %v2070
    %v2206 = vunpack.c.l.b16 %v2071
    %v2207 = vunpack.c.l.b16 %v2072
    %v2208 = vunpack.c.l.b16 %v2073
    %v2209 = vunpack.c.l.b16 %v2074
    %v2210 = vunpack.c.l.b16 %v2075
    %v2211 = vunpack.c.l.b16 %v2076
    %v2212 = vunpack.c.l.b16 %v2077
    %v2213 = vunpack.c.l.b16 %v2078
    %v2214 = vunpack.c.l.b16 %v2079
    %v2215 = vunpack.c.l.b16 %v2080
    %v2216 = vunpack.c.l.b16 %v2081
    %v2217 = vunpack.c.l.b16 %v2082
    %v2218 = vunpack.c.l.b16 %v2083
    %v2219 = vunpack.c.l.b16 %v2084
    %v2220 = vunpack.c.l.b16 %v2085
    %v2221 = vunpack.c.l.b16 %v2086
    %v2222 = vunpack.c.l.b16 %v2087
    %v2223 = vunpack.c.l.b16 %v2088
    %v2224 = vunpack.c.l.b16 %v2089
    %v2225 = vunpack.c.l.b16 %v2090
    %v2226 = vunpack.c.l.b16 %v2091
    %v2227 = vunpack.c.l.b16 %v2092
    %v2228 = vunpack.c.l.b16 %v2093
    %v2229 = vunpack.c.l.b16 %v2094
    %v2230 = vunpack.c.l.b16 %v2095
    %v2231 = vunpack.c.l.b16 %v2096
    %v2232 = vunpack.c.l.b16 %v2097
    %v2233 = vunpack.c.l.b16 %v2098
    %v2234 = vunpack.c.l.b16 %v2099
    %v2235 = vunpack.c.l.b16 %v2100
    %v2236 = vunpack.c.l.b16 %v2101
    %v2237 = vunpack.c.l.b16 %v2102
    %v2238 = vunpack.c.l.b16 %v2103
    %v2239 = vunpack.c.l.b16 %v2104
    %v2240 = vunpack.c.l.b16 %v2105
    %v2241 = vunpack.c.l.b16 %v2106
    %v2242 = vunpack.c.l.b16 %v2107
    %v2243 = vunpack.c.l.b16 %v2108
    %v2244 = vunpack.c.l.b16 %v2109
    %v2245 = vunpack.c.l.b16 %v2110
    %v2246 = vunpack.c.l.b16 %v2111
    %v2247 = vunpack.c.l.b16 %v2112
    %v2248 = vunpack.c.l.b16 %v2113
    %v2249 = vunpack.c.l.b16 %v2114
    %v2250 = vunpack.c.l.b16 %v2115
    %v2251 = vunpack.c.l.b16 %v2116
    %v2252 = vunpack.c.l.b16 %v2117
    %v2253 = vunpack.c.l.b16 %v2118
    %v2254 = vunpack.c.l.b16 %v2119
    %v2255 = vunpack.c.l.b16 %v2120
    %v2256 = vunpack.c.l.b16 %v2121
    %v2257 = vunpack.c.l.b16 %v2122
    %v2258 = vunpack.c.l.b16 %v2123
    %v2259 = vunpack.c.l.b16 %v2124
    %v2260 = vunpack.c.l.b16 %v2125
    %v2261 = vunpack.c.l.b16 %v2126
    %v2262 = vunpack.c.l.b16 %v2127
    %v2263 = vunpack.c.l.b16 %v2128
    %v2264 = vunpack.c.l.b16 %v2129
    %v2265 = vunpack.c.l.b16 %v2130
    %v2266 = vunpack.c.l.b16 %v2131
    %v2267 = vpack.c.b16 %v2204, %v2203
    %v2268 = vpack.c.b16 %v2206, %v2205
    %v2269 = vpack.c.b16 %v2208, %v2207
    %v2270 = vpack.c.b16 %v2210, %v2209
    %v2271 = vpack.c.b16 %v2212, %v2211
    %v2272 = vpack.c.b16 %v2214, %v2213
    %v2273 = vpack.c.b16 %v2216, %v2215
    %v2274 = vpack.c.b16 %v2218, %v2217
    %v2275 = vpack.c.b16 %v2220, %v2219
    %v2276 = vpack.c.b16 %v2222, %v2221
    %v2277 = vpack.c.b16 %v2224, %v2223
    %v2278 = vpack.c.b16 %v2226, %v2225
    %v2279 = vpack.c.b16 %v2228, %v2227
    %v2280 = vpack.c.b16 %v2230, %v2229
    %v2281 = vpack.c.b16 %v2232, %v2231
    %v2282 = vpack.c.b16 %v2234, %v2233
    %v2283 = vpack.c.b16 %v2236, %v2235
    %v2284 = vpack.c.b16 %v2238, %v2237
    %v2285 = vpack.c.b16 %v2240, %v2239
    %v2286 = vpack.c.b16 %v2242, %v2241
    %v2287 = vpack.c.b16 %v2244, %v2243
    %v2288 = vpack.c.b16 %v2246, %v2245
    %v2289 = vpack.c.b16 %v2248, %v2247
    %v2290 = vpack.c.b16 %v2250, %v2249
    %v2291 = vpack.c.b16 %v2252, %v2251
    %v2292 = vpack.c.b16 %v2254, %v2253
    %v2293 = vpack.c.b16 %v2256, %v2255
    %v2294 = vpack.c.b16 %v2258, %v2257
    %v2295 = vpack.c.b16 %v2260, %v2259
    %v2296 = vpack.c.b16 %v2262, %v2261
    %v2297 = vpack.c.b16 %v2264, %v2263
    %v2298 = vpack.c.b16 %v2266, %v2265
    %2331 = vmatprep.subr.bf16.mxu0 0
    %2332 = vmatpush1.bf16.msra.mxu0 %v2274
    %2333 = vmatprep.subr.bf16.mxu0 0
    %2334 = vmatpush1.bf16.msra.mxu0 %v2273
    %2335 = vmatprep.subr.bf16.mxu0 0
    %2336 = vmatpush1.bf16.msra.mxu0 %v2272
    %2337 = vmatprep.subr.bf16.mxu0 0
    %2338 = vmatpush1.bf16.msra.mxu0 %v2271
    %2339 = vmatprep.subr.bf16.mxu0 0
    %2340 = vmatpush1.bf16.msra.mxu0 %v2270
    %2341 = vmatprep.subr.bf16.mxu0 0
    %2342 = vmatpush1.bf16.msra.mxu0 %v2269
    %2343 = vmatprep.subr.bf16.mxu0 0
    %2344 = vmatpush1.bf16.msra.mxu0 %v2268
    %2345 = vmatprep.subr.bf16.mxu0 0
    %2346 = vmatpush1.bf16.msra.mxu0 %v2267
    %2347 = vmatprep.subr.bf16.mxu0 0
    %2348 = vmatpush2.bf16.msra.mxu0 %v2282
    %2349 = vmatprep.subr.bf16.mxu0 0
    %2350 = vmatpush2.bf16.msra.mxu0 %v2281
    %2351 = vmatprep.subr.bf16.mxu0 0
    %2352 = vmatpush2.bf16.msra.mxu0 %v2280
    %2353 = vmatprep.subr.bf16.mxu0 0
    %2354 = vmatpush2.bf16.msra.mxu0 %v2279
    %2355 = vmatprep.subr.bf16.mxu0 0
    %2356 = vmatpush2.bf16.msra.mxu0 %v2278
    %2357 = vmatprep.subr.bf16.mxu0 0
    %2358 = vmatpush2.bf16.msra.mxu0 %v2277
    %2359 = vmatprep.subr.bf16.mxu0 0
    %2360 = vmatpush2.bf16.msra.mxu0 %v2276
    %2361 = vmatprep.subr.bf16.mxu0 0
    %2362 = vmatpush2.bf16.msra.mxu0 %v2275
    %2363 = vmatprep.mubr.bf16.mxu0 %v2061
    %2364 = vmatmul.mubr.bf16.gmra.mxu0 %v2060
    %v2365 = vpop.f32.mrf.mxu0
    %v2366 = vadd.f32 %v2137, %v2365
    %v2367 = vpop.f32.mrf.mxu0
    %v2368 = vpop.f32.mrf.mxu0
    %v2369 = vadd.f32 %v2137, %v2368
    %v2370 = vpop.f32.mrf.mxu0
    %2371 = vdwg.mxu0
    %2372 = vmatprep.subr.bf16.mxu0 0
    %2373 = vmatpush1.bf16.msra.mxu0 %v2290
    %2374 = vmatprep.subr.bf16.mxu0 0
    %2375 = vmatpush1.bf16.msra.mxu0 %v2289
    %2376 = vmatprep.subr.bf16.mxu0 0
    %2377 = vmatpush1.bf16.msra.mxu0 %v2288
    %2378 = vmatprep.subr.bf16.mxu0 0
    %2379 = vmatpush1.bf16.msra.mxu0 %v2287
    %2380 = vmatprep.subr.bf16.mxu0 0
    %2381 = vmatpush1.bf16.msra.mxu0 %v2286
    %2382 = vmatprep.subr.bf16.mxu0 0
    %2383 = vmatpush1.bf16.msra.mxu0 %v2285
    %2384 = vmatprep.subr.bf16.mxu0 0
    %2385 = vmatpush1.bf16.msra.mxu0 %v2284
    %2386 = vmatprep.subr.bf16.mxu0 0
    %2387 = vmatpush1.bf16.msra.mxu0 %v2283
    %2388 = vmatprep.subr.bf16.mxu0 0
    %2389 = vmatpush2.bf16.msra.mxu0 %v2298
    %2390 = vmatprep.subr.bf16.mxu0 0
    %2391 = vmatpush2.bf16.msra.mxu0 %v2297
    %2392 = vmatprep.subr.bf16.mxu0 0
    %2393 = vmatpush2.bf16.msra.mxu0 %v2296
    %2394 = vmatprep.subr.bf16.mxu0 0
    %2395 = vmatpush2.bf16.msra.mxu0 %v2295
    %2396 = vmatprep.subr.bf16.mxu0 0
    %2397 = vmatpush2.bf16.msra.mxu0 %v2294
    %2398 = vmatprep.subr.bf16.mxu0 0
    %2399 = vmatpush2.bf16.msra.mxu0 %v2293
    %2400 = vmatprep.subr.bf16.mxu0 0
    %2401 = vmatpush2.bf16.msra.mxu0 %v2292
    %2402 = vmatprep.subr.bf16.mxu0 0
    %2403 = vmatpush2.bf16.msra.mxu0 %v2291
    %2404 = vmatprep.mubr.bf16.mxu0 %v2063
    %2405 = vmatmul.mubr.bf16.gmra.mxu0 %v2062
    %v2406 = vpop.f32.mrf.mxu0
    %v2407 = vadd.f32 %v2366, %v2406
    %v2408 = vpop.f32.mrf.mxu0
    %v2409 = vpop.f32.mrf.mxu0
    %v2410 = vadd.f32 %v2369, %v2409
    %v2411 = vpop.f32.mrf.mxu0
    %2412 = vdwg.mxu0
    %v2413 = vmul.f32 %v2407, %v2407
    %v2414 = vmul.f32 %v2410, %v2410
    %2415 = vadd.xlane.f32.xlu0 %v2413
    %v2416 = vpop.xlane.xlu0 %2415
    %2417 = vadd.xlane.f32.xlu0 %v2414
    %v2418 = vpop.xlane.xlu0 %2417
    %v2419 = vmax.f32 %v2416, 1e-24
    %v2420 = vmax.f32 %v2418, 1e-24
    %v2421 = vrsqrt.pop %v2419
    %v2422 = vrsqrt.pop %v2420
    %v2423 = vmul.f32 %v2407, %v2421
    %v2424 = vmul.f32 %v2410, %v2422
    %2425 = vst [vmem:[#allocation11] sm:$0xff] %v2423
    %2426 = vst [vmem:[#allocation11 + $0x10] sm:$0xff] %v2424
    %v2427 = vld [vmem:[#allocation10] sm:$0xf]
    %v2428 = vld [vmem:[#allocation10 + $0x4] sm:$0xf]
    %v2429 = vld [vmem:[#allocation10 + $0x8] sm:$0xf]
    %v2430 = vld [vmem:[#allocation10 + $0xc] sm:$0xf]
    %v2431 = vld [vmem:[#allocation10 + $0x10] sm:$0xf]
    %v2432 = vld [vmem:[#allocation10 + $0x14] sm:$0xf]
    %v2433 = vld [vmem:[#allocation10 + $0x18] sm:$0xf]
    %v2434 = vld [vmem:[#allocation10 + $0x1c] sm:$0xf]
    %v2435 = vld [vmem:[#allocation10 + $0x20] sm:$0xf]
    %v2436 = vld [vmem:[#allocation10 + $0x24] sm:$0xf]
    %v2437 = vld [vmem:[#allocation10 + $0x28] sm:$0xf]
    %v2438 = vld [vmem:[#allocation10 + $0x2c] sm:$0xf]
    %v2439 = vld [vmem:[#allocation10 + $0x30] sm:$0xf]
    %v2440 = vld [vmem:[#allocation10 + $0x34] sm:$0xf]
    %v2441 = vld [vmem:[#allocation10 + $0x38] sm:$0xf]
    %v2442 = vld [vmem:[#allocation10 + $0x3c] sm:$0xf]
    %v2443 = vld [vmem:[#allocation10 + $0x40] sm:$0xf]
    %v2444 = vld [vmem:[#allocation10 + $0x44] sm:$0xf]
    %v2445 = vld [vmem:[#allocation10 + $0x48] sm:$0xf]
    %v2446 = vld [vmem:[#allocation10 + $0x4c] sm:$0xf]
    %v2447 = vld [vmem:[#allocation10 + $0x50] sm:$0xf]
    %v2448 = vld [vmem:[#allocation10 + $0x54] sm:$0xf]
    %v2449 = vld [vmem:[#allocation10 + $0x58] sm:$0xf]
    %v2450 = vld [vmem:[#allocation10 + $0x5c] sm:$0xf]
    %v2451 = vld [vmem:[#allocation10 + $0x60] sm:$0xf]
    %v2452 = vld [vmem:[#allocation10 + $0x64] sm:$0xf]
    %v2453 = vld [vmem:[#allocation10 + $0x68] sm:$0xf]
    %v2454 = vld [vmem:[#allocation10 + $0x6c] sm:$0xf]
    %v2455 = vld [vmem:[#allocation10 + $0x70] sm:$0xf]
    %v2456 = vld [vmem:[#allocation10 + $0x74] sm:$0xf]
    %v2457 = vld [vmem:[#allocation10 + $0x78] sm:$0xf]
    %v2458 = vld [vmem:[#allocation10 + $0x7c] sm:$0xf]
    %v2459 = vld [vmem:[#allocation10 + $0x80] sm:$0xf]
    %v2460 = vld [vmem:[#allocation10 + $0x84] sm:$0xf]
    %v2461 = vld [vmem:[#allocation10 + $0x88] sm:$0xf]
    %v2462 = vld [vmem:[#allocation10 + $0x8c] sm:$0xf]
    %v2463 = vld [vmem:[#allocation10 + $0x90] sm:$0xf]
    %v2464 = vld [vmem:[#allocation10 + $0x94] sm:$0xf]
    %v2465 = vld [vmem:[#allocation10 + $0x98] sm:$0xf]
    %v2466 = vld [vmem:[#allocation10 + $0x9c] sm:$0xf]
    %v2467 = vld [vmem:[#allocation10 + $0xa0] sm:$0xf]
    %v2468 = vld [vmem:[#allocation10 + $0xa4] sm:$0xf]
    %v2469 = vld [vmem:[#allocation10 + $0xa8] sm:$0xf]
    %v2470 = vld [vmem:[#allocation10 + $0xac] sm:$0xf]
    %v2471 = vld [vmem:[#allocation10 + $0xb0] sm:$0xf]
    %v2472 = vld [vmem:[#allocation10 + $0xb4] sm:$0xf]
    %v2473 = vld [vmem:[#allocation10 + $0xb8] sm:$0xf]
    %v2474 = vld [vmem:[#allocation10 + $0xbc] sm:$0xf]
    %v2475 = vld [vmem:[#allocation10 + $0xc0] sm:$0xf]
    %v2476 = vld [vmem:[#allocation10 + $0xc4] sm:$0xf]
    %v2477 = vld [vmem:[#allocation10 + $0xc8] sm:$0xf]
    %v2478 = vld [vmem:[#allocation10 + $0xcc] sm:$0xf]
    %v2479 = vld [vmem:[#allocation10 + $0xd0] sm:$0xf]
    %v2480 = vld [vmem:[#allocation10 + $0xd4] sm:$0xf]
    %v2481 = vld [vmem:[#allocation10 + $0xd8] sm:$0xf]
    %v2482 = vld [vmem:[#allocation10 + $0xdc] sm:$0xf]
    %v2483 = vld [vmem:[#allocation10 + $0xe0] sm:$0xf]
    %v2484 = vld [vmem:[#allocation10 + $0xe4] sm:$0xf]
    %v2485 = vld [vmem:[#allocation10 + $0xe8] sm:$0xf]
    %v2486 = vld [vmem:[#allocation10 + $0xec] sm:$0xf]
    %v2487 = vld [vmem:[#allocation10 + $0xf0] sm:$0xf]
    %v2488 = vld [vmem:[#allocation10 + $0xf4] sm:$0xf]
    %v2489 = vld [vmem:[#allocation10 + $0xf8] sm:$0xf]
    %v2490 = vld [vmem:[#allocation10 + $0xfc] sm:$0xf]
    %v2491 = vld [vmem:[%s6] sm:$0x1]
    %v2493 = vlaneseq
    %v2494 = vshrl.u32 %v2493, 7
    %v2495 = vsub.s32 0, %v2494
    %v2496 = vrot.slane %v2491, %v2495
    %v2562 = vunpack.c.l.b16 %v2427
    %v2563 = vunpack.c.l.b16 %v2428
    %v2564 = vunpack.c.l.b16 %v2429
    %v2565 = vunpack.c.l.b16 %v2430
    %v2566 = vunpack.c.l.b16 %v2431
    %v2567 = vunpack.c.l.b16 %v2432
    %v2568 = vunpack.c.l.b16 %v2433
    %v2569 = vunpack.c.l.b16 %v2434
    %v2570 = vunpack.c.l.b16 %v2435
    %v2571 = vunpack.c.l.b16 %v2436
    %v2572 = vunpack.c.l.b16 %v2437
    %v2573 = vunpack.c.l.b16 %v2438
    %v2574 = vunpack.c.l.b16 %v2439
    %v2575 = vunpack.c.l.b16 %v2440
    %v2576 = vunpack.c.l.b16 %v2441
    %v2577 = vunpack.c.l.b16 %v2442
    %v2578 = vunpack.c.l.b16 %v2443
    %v2579 = vunpack.c.l.b16 %v2444
    %v2580 = vunpack.c.l.b16 %v2445
    %v2581 = vunpack.c.l.b16 %v2446
    %v2582 = vunpack.c.l.b16 %v2447
    %v2583 = vunpack.c.l.b16 %v2448
    %v2584 = vunpack.c.l.b16 %v2449
    %v2585 = vunpack.c.l.b16 %v2450
    %v2586 = vunpack.c.l.b16 %v2451
    %v2587 = vunpack.c.l.b16 %v2452
    %v2588 = vunpack.c.l.b16 %v2453
    %v2589 = vunpack.c.l.b16 %v2454
    %v2590 = vunpack.c.l.b16 %v2455
    %v2591 = vunpack.c.l.b16 %v2456
    %v2592 = vunpack.c.l.b16 %v2457
    %v2593 = vunpack.c.l.b16 %v2458
    %v2594 = vunpack.c.l.b16 %v2459
    %v2595 = vunpack.c.l.b16 %v2460
    %v2596 = vunpack.c.l.b16 %v2461
    %v2597 = vunpack.c.l.b16 %v2462
    %v2598 = vunpack.c.l.b16 %v2463
    %v2599 = vunpack.c.l.b16 %v2464
    %v2600 = vunpack.c.l.b16 %v2465
    %v2601 = vunpack.c.l.b16 %v2466
    %v2602 = vunpack.c.l.b16 %v2467
    %v2603 = vunpack.c.l.b16 %v2468
    %v2604 = vunpack.c.l.b16 %v2469
    %v2605 = vunpack.c.l.b16 %v2470
    %v2606 = vunpack.c.l.b16 %v2471
    %v2607 = vunpack.c.l.b16 %v2472
    %v2608 = vunpack.c.l.b16 %v2473
    %v2609 = vunpack.c.l.b16 %v2474
    %v2610 = vunpack.c.l.b16 %v2475
    %v2611 = vunpack.c.l.b16 %v2476
    %v2612 = vunpack.c.l.b16 %v2477
    %v2613 = vunpack.c.l.b16 %v2478
    %v2614 = vunpack.c.l.b16 %v2479
    %v2615 = vunpack.c.l.b16 %v2480
    %v2616 = vunpack.c.l.b16 %v2481
    %v2617 = vunpack.c.l.b16 %v2482
    %v2618 = vunpack.c.l.b16 %v2483
    %v2619 = vunpack.c.l.b16 %v2484
    %v2620 = vunpack.c.l.b16 %v2485
    %v2621 = vunpack.c.l.b16 %v2486
    %v2622 = vunpack.c.l.b16 %v2487
    %v2623 = vunpack.c.l.b16 %v2488
    %v2624 = vunpack.c.l.b16 %v2489
    %v2625 = vunpack.c.l.b16 %v2490
    %v2626 = vpack.c.b16 %v2563, %v2562
    %v2627 = vpack.c.b16 %v2565, %v2564
    %v2628 = vpack.c.b16 %v2567, %v2566
    %v2629 = vpack.c.b16 %v2569, %v2568
    %v2630 = vpack.c.b16 %v2571, %v2570
    %v2631 = vpack.c.b16 %v2573, %v2572
    %v2632 = vpack.c.b16 %v2575, %v2574
    %v2633 = vpack.c.b16 %v2577, %v2576
    %v2634 = vpack.c.b16 %v2579, %v2578
    %v2635 = vpack.c.b16 %v2581, %v2580
    %v2636 = vpack.c.b16 %v2583, %v2582
    %v2637 = vpack.c.b16 %v2585, %v2584
    %v2638 = vpack.c.b16 %v2587, %v2586
    %v2639 = vpack.c.b16 %v2589, %v2588
    %v2640 = vpack.c.b16 %v2591, %v2590
    %v2641 = vpack.c.b16 %v2593, %v2592
    %v2642 = vpack.c.b16 %v2595, %v2594
    %v2643 = vpack.c.b16 %v2597, %v2596
    %v2644 = vpack.c.b16 %v2599, %v2598
    %v2645 = vpack.c.b16 %v2601, %v2600
    %v2646 = vpack.c.b16 %v2603, %v2602
    %v2647 = vpack.c.b16 %v2605, %v2604
    %v2648 = vpack.c.b16 %v2607, %v2606
    %v2649 = vpack.c.b16 %v2609, %v2608
    %v2650 = vpack.c.b16 %v2611, %v2610
    %v2651 = vpack.c.b16 %v2613, %v2612
    %v2652 = vpack.c.b16 %v2615, %v2614
    %v2653 = vpack.c.b16 %v2617, %v2616
    %v2654 = vpack.c.b16 %v2619, %v2618
    %v2655 = vpack.c.b16 %v2621, %v2620
    %v2656 = vpack.c.b16 %v2623, %v2622
    %v2657 = vpack.c.b16 %v2625, %v2624
    %2690 = vmatprep.subr.bf16.mxu0 0
    %2691 = vmatpush1.bf16.msra.mxu0 %v2633
    %2692 = vmatprep.subr.bf16.mxu0 0
    %2693 = vmatpush1.bf16.msra.mxu0 %v2632
    %2694 = vmatprep.subr.bf16.mxu0 0
    %2695 = vmatpush1.bf16.msra.mxu0 %v2631
    %2696 = vmatprep.subr.bf16.mxu0 0
    %2697 = vmatpush1.bf16.msra.mxu0 %v2630
    %2698 = vmatprep.subr.bf16.mxu0 0
    %2699 = vmatpush1.bf16.msra.mxu0 %v2629
    %2700 = vmatprep.subr.bf16.mxu0 0
    %2701 = vmatpush1.bf16.msra.mxu0 %v2628
    %2702 = vmatprep.subr.bf16.mxu0 0
    %2703 = vmatpush1.bf16.msra.mxu0 %v2627
    %2704 = vmatprep.subr.bf16.mxu0 0
    %2705 = vmatpush1.bf16.msra.mxu0 %v2626
    %2706 = vmatprep.subr.bf16.mxu0 0
    %2707 = vmatpush2.bf16.msra.mxu0 %v2641
    %2708 = vmatprep.subr.bf16.mxu0 0
    %2709 = vmatpush2.bf16.msra.mxu0 %v2640
    %2710 = vmatprep.subr.bf16.mxu0 0
    %2711 = vmatpush2.bf16.msra.mxu0 %v2639
    %2712 = vmatprep.subr.bf16.mxu0 0
    %2713 = vmatpush2.bf16.msra.mxu0 %v2638
    %2714 = vmatprep.subr.bf16.mxu0 0
    %2715 = vmatpush2.bf16.msra.mxu0 %v2637
    %2716 = vmatprep.subr.bf16.mxu0 0
    %2717 = vmatpush2.bf16.msra.mxu0 %v2636
    %2718 = vmatprep.subr.bf16.mxu0 0
    %2719 = vmatpush2.bf16.msra.mxu0 %v2635
    %2720 = vmatprep.subr.bf16.mxu0 0
    %2721 = vmatpush2.bf16.msra.mxu0 %v2634
    %2722 = vmatprep.mubr.bf16.mxu0 %v2065
    %2723 = vmatmul.mubr.bf16.gmra.mxu0 %v2064
    %v2724 = vpop.f32.mrf.mxu0
    %v2725 = vadd.f32 %v2496, %v2724
    %v2726 = vpop.f32.mrf.mxu0
    %v2727 = vpop.f32.mrf.mxu0
    %v2728 = vadd.f32 %v2496, %v2727
    %v2729 = vpop.f32.mrf.mxu0
    %2730 = vdwg.mxu0
    %2731 = vmatprep.subr.bf16.mxu0 0
    %2732 = vmatpush1.bf16.msra.mxu0 %v2649
    %2733 = vmatprep.subr.bf16.mxu0 0
    %2734 = vmatpush1.bf16.msra.mxu0 %v2648
    %2735 = vmatprep.subr.bf16.mxu0 0
    %2736 = vmatpush1.bf16.msra.mxu0 %v2647
    %2737 = vmatprep.subr.bf16.mxu0 0
    %2738 = vmatpush1.bf16.msra.mxu0 %v2646
    %2739 = vmatprep.subr.bf16.mxu0 0
    %2740 = vmatpush1.bf16.msra.mxu0 %v2645
    %2741 = vmatprep.subr.bf16.mxu0 0
    %2742 = vmatpush1.bf16.msra.mxu0 %v2644
    %2743 = vmatprep.subr.bf16.mxu0 0
    %2744 = vmatpush1.bf16.msra.mxu0 %v2643
    %2745 = vmatprep.subr.bf16.mxu0 0
    %2746 = vmatpush1.bf16.msra.mxu0 %v2642
    %2747 = vmatprep.subr.bf16.mxu0 0
    %2748 = vmatpush2.bf16.msra.mxu0 %v2657
    %2749 = vmatprep.subr.bf16.mxu0 0
    %2750 = vmatpush2.bf16.msra.mxu0 %v2656
    %2751 = vmatprep.subr.bf16.mxu0 0
    %2752 = vmatpush2.bf16.msra.mxu0 %v2655
    %2753 = vmatprep.subr.bf16.mxu0 0
    %2754 = vmatpush2.bf16.msra.mxu0 %v2654
    %2755 = vmatprep.subr.bf16.mxu0 0
    %2756 = vmatpush2.bf16.msra.mxu0 %v2653
    %2757 = vmatprep.subr.bf16.mxu0 0
    %2758 = vmatpush2.bf16.msra.mxu0 %v2652
    %2759 = vmatprep.subr.bf16.mxu0 0
    %2760 = vmatpush2.bf16.msra.mxu0 %v2651
    %2761 = vmatprep.subr.bf16.mxu0 0
    %2762 = vmatpush2.bf16.msra.mxu0 %v2650
    %2763 = vmatprep.mubr.bf16.mxu0 %v2067
    %2764 = vmatmul.mubr.bf16.gmra.mxu0 %v2066
    %v2765 = vpop.f32.mrf.mxu0
    %v2766 = vadd.f32 %v2725, %v2765
    %v2767 = vpop.f32.mrf.mxu0
    %v2768 = vpop.f32.mrf.mxu0
    %v2769 = vadd.f32 %v2728, %v2768
    %v2770 = vpop.f32.mrf.mxu0
    %2771 = vdwg.mxu0
    %2772 = vst [vmem:[#allocation11 + $0x8] sm:$0xff] %v2766
    %2773 = vst [vmem:[#allocation11 + $0x18] sm:$0xff] %v2769
    // Predicated region
    $region50: #{tpu_custom_call.1} parent=1 // pred_check
      _
    $region51: #{tpu_custom_call.1} parent=1 // pred_check_branch
      %2775 = sbr.rel (0) target = $region53
    $region52: #{tpu_custom_call.1} parent=1 // pred_region
      %s2777 = ssub.s32 512, 512
      %2778 = vsyncadd [#allocation4], %s2777
      %s2779 = sshll.u32 [#allocation11], 4
      %s2780 = int_to_ptr.vmem [resolvable:$true] %s2779
      %2785 = dma.vmem_to_hbm [thread:$0]  %s2780, 512, %s7, [#allocation4], 256, 256, 16
    $region53: #{tpu_custom_call.1} parent=1 // pred_fallthru
      _
    // Predicated region
    $region54: #{tpu_custom_call.1} parent=1 // pred_check
      _
    $region55: #{tpu_custom_call.1} parent=1 // pred_check_branch
      %2787 = sbr.rel (0) target = $region57
    $region56: #{tpu_custom_call.1} parent=1 // pred_region
      %2788 = dma.done [#allocation4], 512
    $region57: #{tpu_custom_call.1} parent=1 // pred_fallthru
      _
    %2789 = vsyncpa [#allocation3], 1
    %2790 = vsyncpa [#allocation6], 1
    %2791 = vsyncpa [#allocation9], 1
    %2792 = vsyncpa [#allocation4], 1

</llo_original>
